<compile_context>
chip_gen: v5e
topology: v5e:2x2
jax: 0.10.0
libtpu: 0.0.40
codegen_flags: <defaults>
</compile_context>

<pallas_src>
import jax
import jax.numpy as jnp
from jax.experimental import pallas as pl
from jax.experimental.pallas import tpu as pltpu

NEG_SLOPE = 0.2          # fixed LeakyReLU slope from the module
OUTPUT_DIM = 128
BN_EPS = 1e-5
TILE_N = 8192            # output-feature tile width (16384 / 8192 = 2 steps)


# ----------------------------------------------------------------------------
# Fused kernel: [Linear(+folded BN) -> LeakyReLU(0.2)] * L  ->  output Linear
# ----------------------------------------------------------------------------
def fused_forward_kernel(x_ref, *refs):
    """refs = (w0', b0', w1', b1', ..., w_out_tile, b_out_tile, out_tile).

    Hidden params are tiny full-array VMEM tiles with eval-mode BatchNorm
    already folded in (w' = w*scale, b' = b*scale + shift). The hidden stack
    (~3 KFLOP) is recomputed per output tile so the grid axis stays
    'parallel' (megacore-safe, no cross-step state); with only 2 grid steps
    the recompute cost is negligible and the block index for these inputs is
    constant, so Pallas does not re-DMA them.
    """
    out_ref = refs[-1]
    b_out_ref = refs[-2]
    w_out_ref = refs[-3]
    param_refs = refs[:-3]
    n_layers = len(param_refs) // 2

    h = x_ref[...]                                     # (Bp, in) float32
    for l in range(n_layers):
        w = param_refs[2 * l][...]                     # (in, hidden) folded
        b = param_refs[2 * l + 1][...]                 # (1, hidden)  folded
        y = jnp.dot(h, w, preferred_element_type=jnp.float32) + b
        h = jnp.where(y >= 0.0, y, NEG_SLOPE * y)      # leaky_relu(0.2)
        # Dropout: identity in eval mode.

    # Output Linear for this tile: bf16 inputs, f32 accumulation on the MXU.
    acc = jnp.dot(h.astype(jnp.bfloat16), w_out_ref[...],
                  preferred_element_type=jnp.float32)
    out_ref[...] = acc + b_out_ref[...]


# ----------------------------------------------------------------------------
# Wrapper
# ----------------------------------------------------------------------------
def _replicated_spec(shape):
    ndim = len(shape)
    return pl.BlockSpec(shape, lambda j, _n=ndim: (0,) * _n)


@jax.jit
def ann_flowfield_forward(x, hidden_params, w_out_bf16, b_out):
    """hidden_params: list of (w_folded, b_folded); w_out_bf16 pre-cast bf16."""
    B, in_features = x.shape
    H = hidden_params[-1][0].shape[1]
    N = w_out_bf16.shape[1]
    assert N % TILE_N == 0, (N, TILE_N)
    # Weight must be pre-cast ONCE outside jit (no per-call convert op here).
    assert w_out_bf16.dtype == jnp.bfloat16, w_out_bf16.dtype

    # Pad batch to full 8-row sublane tiles (unmasked stores); slice off after.
    B_pad = ((B + 7) // 8) * 8
    if B_pad != B:
        x = jnp.pad(x, ((0, B_pad - B), (0, 0)))

    flat_params = []
    in_specs = [_replicated_spec((B_pad, in_features))]
    for (w, b) in hidden_params:
        for p in (w, b):
            flat_params.append(p)
            in_specs.append(_replicated_spec(p.shape))
    in_specs.append(pl.BlockSpec((H, TILE_N), lambda j: (0, j)))   # w_out tile
    in_specs.append(pl.BlockSpec((1, TILE_N), lambda j: (0, j)))   # b_out tile

    y = pl.pallas_call(
        fused_forward_kernel,
        out_shape=jax.ShapeDtypeStruct((B_pad, N), jnp.float32),
        grid=(N // TILE_N,),
        in_specs=in_specs,
        out_specs=pl.BlockSpec((B_pad, TILE_N), lambda j: (0, j)),
        # VMEM worst case per step: 512 KiB w_out (bf16) + 256 KiB out (f32),
        # double-buffered -> < 2 MiB; far under every generation's limit.
        # v7x note: if "parallel" alone doesn't shard the 2 steps across the
        # two TensorCores, switch to pltpu.CORE_PARALLEL / pl.core_map.
        compiler_params=pltpu.CompilerParams(
            dimension_semantics=("parallel",)
        ),
    )(x, *flat_params, w_out_bf16, b_out)

    return y[:B].reshape(-1, 1, OUTPUT_DIM, OUTPUT_DIM)


# ----------------------------------------------------------------------------
# Deterministic parameter construction (synthetic, PyTorch-like init)
# ----------------------------------------------------------------------------
def make_params(key, input_size, hidden_size, hidden_number, output_size):
    """Returns raw f32 parameters mirroring the PyTorch module (eval mode)."""
    def linear(key, fan_in, fan_out):
        k1, k2 = jax.random.split(key)
        bound = 1.0 / (fan_in ** 0.5)
        w = jax.random.uniform(k1, (fan_in, fan_out), jnp.float32, -bound, bound)
        b = jax.random.uniform(k2, (1, fan_out), jnp.float32, -bound, bound)
        return w, b

    hidden_raw = []
    prev = input_size
    for _ in range(hidden_number):
        key, k_lin, k_g, k_b, k_m, k_v = jax.random.split(key, 6)
        w, b = linear(k_lin, prev, hidden_size)
        gamma = jax.random.uniform(k_g, (1, hidden_size), jnp.float32, 0.5, 1.5)
        beta = jax.random.uniform(k_b, (1, hidden_size), jnp.float32, -0.1, 0.1)
        run_mean = jax.random.uniform(k_m, (1, hidden_size), jnp.float32, -0.2, 0.2)
        run_var = jax.random.uniform(k_v, (1, hidden_size), jnp.float32, 0.5, 1.5)
        hidden_raw.append((w, b, gamma, beta, run_mean, run_var))
        prev = hidden_size

    key, k_out = jax.random.split(key)
    w_out, b_out = linear(k_out, prev, output_size)
    return hidden_raw, w_out, b_out


def prepare_kernel_params(hidden_raw, w_out, b_out):
    """One-time (outside jit) preparation:
       - fold eval BatchNorm1d + bias into each hidden Linear,
       - cast the large output weight to bf16 exactly once."""
    hidden_folded = []
    for (w, b, gamma, beta, run_mean, run_var) in hidden_raw:
        scale = gamma * jax.lax.rsqrt(run_var + BN_EPS)   # (1, H)
        shift = beta - run_mean * scale                    # (1, H)
        w_f = w * scale                                    # fold into weights
        b_f = b * scale + shift                            # fold into bias
        hidden_folded.append((w_f, b_f))
    w_out_bf16 = w_out.astype(jnp.bfloat16)                # persistent bf16 copy
    return hidden_folded, w_out_bf16, b_out


# Pure-JAX float32 reference (explicit BN, matches PyTorch eval forward).
def reference_forward(x, hidden_raw, w_out, b_out):
    h = x
    for (w, b, gamma, beta, run_mean, run_var) in hidden_raw:
        y = h @ w + b
        y = (y - run_mean) * jax.lax.rsqrt(run_var + BN_EPS) * gamma + beta
        h = jnp.where(y >= 0.0, y, NEG_SLOPE * y)
        # Dropout: identity in eval mode.
    y = h @ w_out + b_out
    return y.reshape(-1, 1, OUTPUT_DIM, OUTPUT_DIM)


if __name__ == "__main__":
    batch = 4
    input_size = 12
    hidden_size = 32
    hidden_number = 2
    output_size = OUTPUT_DIM * OUTPUT_DIM  # 16384

    key = jax.random.PRNGKey(0)
    key, k_x, k_p = jax.random.split(key, 3)
    x = jax.random.normal(k_x, (batch, input_size), jnp.float32)
    hidden_raw, w_out, b_out = make_params(
        k_p, input_size, hidden_size, hidden_number, output_size
    )

    # One-time preparation OUTSIDE the jitted per-call path: fold BN into the
    # hidden Linears and cast w_out to bf16 once (persistent bf16 weights).
    hidden_folded, w_out_bf16, b_out_k = prepare_kernel_params(
        hidden_raw, w_out, b_out
    )
    hidden_folded = jax.block_until_ready(hidden_folded)
    w_out_bf16 = jax.block_until_ready(w_out_bf16)

    out = ann_flowfield_forward(x, hidden_folded, w_out_bf16, b_out_k)
    out = jax.block_until_ready(out)
    assert out.shape == (batch, 1, OUTPUT_DIM, OUTPUT_DIM), out.shape

    # f32 reference; tolerance loosened slightly since w_out is streamed as
    # bf16 inside the kernel (f32 accumulation on the MXU).
    ref = reference_forward(x, hidden_raw, w_out, b_out)
    max_err = float(jnp.max(jnp.abs(out - ref)))
    assert jnp.allclose(out, ref, atol=5e-2, rtol=5e-2), max_err

    print("KERNEL_OK")
</pallas_src>

<mosaic_0001>
module attributes {stable_mosaic.version = 11 : i64} {
  func.func @fused_forward_kernel(%arg0: i32, %arg1: memref<8x12xf32, #tpu.memory_space<vmem>>, %arg2: memref<12x32xf32, #tpu.memory_space<vmem>>, %arg3: memref<1x32xf32, #tpu.memory_space<vmem>>, %arg4: memref<32x32xf32, #tpu.memory_space<vmem>>, %arg5: memref<1x32xf32, #tpu.memory_space<vmem>>, %arg6: memref<32x8192xbf16, #tpu.memory_space<vmem>>, %arg7: memref<1x8192xf32, #tpu.memory_space<vmem>>, %arg8: memref<8x8192xf32, #tpu.memory_space<vmem>>) attributes {dimension_semantics = [#tpu.dimension_semantics<parallel>], iteration_bounds = array<i64: 2>, scalar_prefetch = 0 : i64, scratch_operands = 0 : i64, tpu.core_type = #tpu.core_type<tc>, window_params = [{pipeline_mode = #tpu.pipeline_mode<synchronous>, transform_indices = @transform_0, window_bounds = array<i64: 8, 12>}, {pipeline_mode = #tpu.pipeline_mode<synchronous>, transform_indices = @transform_1, window_bounds = array<i64: 12, 32>}, {pipeline_mode = #tpu.pipeline_mode<synchronous>, transform_indices = @transform_2, window_bounds = array<i64: 1, 32>}, {pipeline_mode = #tpu.pipeline_mode<synchronous>, transform_indices = @transform_3, window_bounds = array<i64: 32, 32>}, {pipeline_mode = #tpu.pipeline_mode<synchronous>, transform_indices = @transform_4, window_bounds = array<i64: 1, 32>}, {transform_indices = @transform_5, window_bounds = array<i64: 32, 8192>}, {transform_indices = @transform_6, window_bounds = array<i64: 1, 8192>}, {transform_indices = @transform_7, window_bounds = array<i64: 8, 8192>}]} {
    %c0 = arith.constant 0 : index
    %c0_0 = arith.constant 0 : index
    %0 = vector.load %arg1[%c0, %c0_0] : memref<8x12xf32, #tpu.memory_space<vmem>>, vector<8x12xf32>
    %c0_1 = arith.constant 0 : index
    %c0_2 = arith.constant 0 : index
    %1 = vector.load %arg2[%c0_1, %c0_2] : memref<12x32xf32, #tpu.memory_space<vmem>>, vector<12x32xf32>
    %c0_3 = arith.constant 0 : index
    %c0_4 = arith.constant 0 : index
    %2 = vector.load %arg3[%c0_3, %c0_4] : memref<1x32xf32, #tpu.memory_space<vmem>>, vector<1x32xf32>
    %cst = arith.constant dense<0.000000e+00> : vector<8x32xf32>
    %3 = tpu.matmul %0, %1, %cst {dimension_numbers = #tpu.dot_dimension_numbers<[1], [0], [0], [1], [0, 0, 1, 1], [], []>} : vector<8x12xf32>, vector<12x32xf32>, vector<8x32xf32> -> vector<8x32xf32>
    %4 = vector.broadcast %2 : vector<1x32xf32> to vector<8x32xf32>
    %5 = arith.addf %3, %4 : vector<8x32xf32>
    %cst_5 = arith.constant 0.000000e+00 : f32
    %6 = vector.broadcast %cst_5 : f32 to vector<8x32xf32>
    %7 = arith.cmpf oge, %5, %6 : vector<8x32xf32>
    %cst_6 = arith.constant 2.000000e-01 : f32
    %8 = vector.broadcast %cst_6 : f32 to vector<8x32xf32>
    %9 = arith.mulf %8, %5 : vector<8x32xf32>
    %10 = arith.select %7, %5, %9 : vector<8x32xi1>, vector<8x32xf32>
    %c0_7 = arith.constant 0 : index
    %c0_8 = arith.constant 0 : index
    %11 = vector.load %arg4[%c0_7, %c0_8] : memref<32x32xf32, #tpu.memory_space<vmem>>, vector<32x32xf32>
    %c0_9 = arith.constant 0 : index
    %c0_10 = arith.constant 0 : index
    %12 = vector.load %arg5[%c0_9, %c0_10] : memref<1x32xf32, #tpu.memory_space<vmem>>, vector<1x32xf32>
    %cst_11 = arith.constant dense<0.000000e+00> : vector<8x32xf32>
    %13 = tpu.matmul %10, %11, %cst_11 {dimension_numbers = #tpu.dot_dimension_numbers<[1], [0], [0], [1], [0, 0, 1, 1], [], []>} : vector<8x32xf32>, vector<32x32xf32>, vector<8x32xf32> -> vector<8x32xf32>
    %14 = vector.broadcast %12 : vector<1x32xf32> to vector<8x32xf32>
    %15 = arith.addf %13, %14 : vector<8x32xf32>
    %cst_12 = arith.constant 0.000000e+00 : f32
    %16 = vector.broadcast %cst_12 : f32 to vector<8x32xf32>
    %17 = arith.cmpf oge, %15, %16 : vector<8x32xf32>
    %cst_13 = arith.constant 2.000000e-01 : f32
    %18 = vector.broadcast %cst_13 : f32 to vector<8x32xf32>
    %19 = arith.mulf %18, %15 : vector<8x32xf32>
    %20 = arith.select %17, %15, %19 : vector<8x32xi1>, vector<8x32xf32>
    %21 = arith.truncf %20 : vector<8x32xf32> to vector<8x32xbf16>
    %c0_14 = arith.constant 0 : index
    %c0_15 = arith.constant 0 : index
    %22 = vector.load %arg6[%c0_14, %c0_15] : memref<32x8192xbf16, #tpu.memory_space<vmem>>, vector<32x8192xbf16>
    %cst_16 = arith.constant dense<0.000000e+00> : vector<8x8192xf32>
    %23 = tpu.matmul %21, %22, %cst_16 {dimension_numbers = #tpu.dot_dimension_numbers<[1], [0], [0], [1], [0, 0, 1, 1], [], []>} : vector<8x32xbf16>, vector<32x8192xbf16>, vector<8x8192xf32> -> vector<8x8192xf32>
    %c0_17 = arith.constant 0 : index
    %c0_18 = arith.constant 0 : index
    %24 = vector.load %arg7[%c0_17, %c0_18] : memref<1x8192xf32, #tpu.memory_space<vmem>>, vector<1x8192xf32>
    %25 = vector.broadcast %24 : vector<1x8192xf32> to vector<8x8192xf32>
    %26 = arith.addf %23, %25 : vector<8x8192xf32>
    %c0_19 = arith.constant 0 : index
    %c0_20 = arith.constant 0 : index
    %27 = vector.load %arg8[%c0_19, %c0_20] : memref<8x8192xf32, #tpu.memory_space<vmem>>, vector<8x8192xf32>
    tpu.vector_store %arg8[%c0_19, %c0_20], %26 {strides = array<i32>} : memref<8x8192xf32, #tpu.memory_space<vmem>>, vector<8x8192xf32>,
    return
  }
  func.func @transform_0(%arg0: i32) -> (i32, i32) {
    %c0_i32 = arith.constant 0 : i32
    %c0_i32_0 = arith.constant 0 : i32
    %c0_i32_1 = arith.constant 0 : i32
    return %c0_i32, %c0_i32_0 : i32, i32
  }
  func.func @transform_1(%arg0: i32) -> (i32, i32) {
    %c0_i32 = arith.constant 0 : i32
    %c0_i32_0 = arith.constant 0 : i32
    %c0_i32_1 = arith.constant 0 : i32
    return %c0_i32, %c0_i32_0 : i32, i32
  }
  func.func @transform_2(%arg0: i32) -> (i32, i32) {
    %c0_i32 = arith.constant 0 : i32
    %c0_i32_0 = arith.constant 0 : i32
    %c0_i32_1 = arith.constant 0 : i32
    return %c0_i32, %c0_i32_0 : i32, i32
  }
  func.func @transform_3(%arg0: i32) -> (i32, i32) {
    %c0_i32 = arith.constant 0 : i32
    %c0_i32_0 = arith.constant 0 : i32
    %c0_i32_1 = arith.constant 0 : i32
    return %c0_i32, %c0_i32_0 : i32, i32
  }
  func.func @transform_4(%arg0: i32) -> (i32, i32) {
    %c0_i32 = arith.constant 0 : i32
    %c0_i32_0 = arith.constant 0 : i32
    %c0_i32_1 = arith.constant 0 : i32
    return %c0_i32, %c0_i32_0 : i32, i32
  }
  func.func @transform_5(%arg0: i32) -> (i32, i32) {
    %c0_i32 = arith.constant 0 : i32
    %c0_i32_0 = arith.constant 0 : i32
    return %c0_i32, %arg0 : i32, i32
  }
  func.func @transform_6(%arg0: i32) -> (i32, i32) {
    %c0_i32 = arith.constant 0 : i32
    %c0_i32_0 = arith.constant 0 : i32
    return %c0_i32, %arg0 : i32, i32
  }
  func.func @transform_7(%arg0: i32) -> (i32, i32) {
    %c0_i32 = arith.constant 0 : i32
    %c0_i32_0 = arith.constant 0 : i32
    return %c0_i32, %arg0 : i32, i32
  }
}

</mosaic_0001>

<llo_original>
// kernel: ann_flowfield_forward.1
$region0: #{ann_flowfield_forward.1}
  #allocation0 [shape = 'u32[]', space=smem, size = 0x4, offset = 0x4, fixed_abs, tag = 'smem constant byte address 0x4 - core index']
  #allocation1 [shape = 'u32[72,128]{1,0:T(1,128)}', space=vmem, size = 0x9000, scoped, tag = 'internal scratch']
  %s0 = inlined_call_operand.vmem [shape: f32[8,12], index: 0, kind: input, shape index: {}]
  %s1 = inlined_call_operand.hbm [shape: f32[12,32], index: 1, kind: input, shape index: {}]
  %s2 = inlined_call_operand.vmem [shape: f32[1,32], index: 2, kind: input, shape index: {}]
  %s3 = inlined_call_operand.hbm [shape: f32[32,32], index: 3, kind: input, shape index: {}]
  %s4 = inlined_call_operand.vmem [shape: f32[1,32], index: 4, kind: input, shape index: {}]
  %s5 = inlined_call_operand.hbm [shape: bf16[32,16384], index: 5, kind: input, shape index: {}]
  %s6 = inlined_call_operand.hbm [shape: f32[1,16384], index: 6, kind: input, shape index: {}]
  %s7 = inlined_call_operand.vmem [shape: f32[8,16384], index: 7, kind: output, shape index: {}]
  %s8 = sld [smem:[#allocation0]]
  $region77: #{ann_flowfield_forward.1} parent=0
    _
  %s10 = ssub.s32 1, %s8
  %s11 = scalar_select 0, %s10, %s8
  $region1: #{ann_flowfield_forward.1} parent=0
    #allocation2 [shape = 'u8[8192]{0}', space=vmem, size = 0x2000, scoped, tag = 'input window, operand 1, single buffered']
    #allocation3 [shape = 's32[2]{0}', space=sflag, size = 0x8, scoped, tag = 'scoped memory for ann_flowfield_forward.1']
    #allocation4 [shape = 'u8[16384]{0}', space=vmem, size = 0x4000, scoped, tag = 'input window, operand 3, single buffered']
    #allocation5 [shape = 's32[1]{0}', space=sflag, size = 0x4, scoped, tag = 'scoped memory for ann_flowfield_forward.1']
    #allocation6 [shape = 'u8[1048576]{0}', space=vmem, size = 0x100000, scoped, tag = 'input window, operand 5']
    #allocation7 [shape = 'u8[65536]{0}', space=vmem, size = 0x10000, scoped, tag = 'input window, operand 6']
    %12 = vsyncpa [#allocation3], 0
    %13 = vsyncpa [#allocation5], 0
    loop: start=0, step=1, limit=4
    $region2: #{ann_flowfield_forward.1} parent=1 // loop_pre_header
      _
    $region3: #{ann_flowfield_forward.1} parent=1 // loop_header
      %s15 = sphi 0, %s19
      %p16 = scmp.ge.s32.totalorder %s15, 4
      %s23 = sphi 0, %s23
      %s25 = sphi 0, %s23
      %s26 = sphi 0, %s25
      %s40 = sphi 0, %s26
      %s44 = sphi 0, %s44
      %s46 = sphi 0, %s44
      %s47 = sphi 0, %s46
      %s61 = sphi 0, %s47
      %s65 = sphi 0, %s65
      %s67 = sphi 0, %s65
      %s68 = sphi 0, %s67
      %s82 = sphi 0, %s68
      %s86 = sphi 0, %s86
      %s88 = sphi 0, %s86
      %s89 = sphi 0, %s88
      %s103 = sphi 0, %s89
      %s107 = sphi 0, %s107
      %s109 = sphi 0, %s107
      %s110 = sphi 0, %s109
      %s124 = sphi 0, %s110
      %s130 = sphi 0, %s132
      %s133 = sphi 0, %s130
      %s134 = sphi 0, %s133
      %s150 = sphi 0, %s134
      %s156 = sphi 0, %s158
      %s159 = sphi 0, %s156
      %s160 = sphi 0, %s159
      %s176 = sphi 0, %s160
      %s182 = sphi 0, %s184
      %s185 = sphi 0, %s182
      %s186 = sphi 0, %s185
      %s202 = sphi 0, %s186
    $region4: #{ann_flowfield_forward.1} parent=1 // loop_header_branch
      %18 = sbr.rel (%p16) target = $region8
    $region5: #{ann_flowfield_forward.1} parent=1 // loop_body
      %s20 = ssub.s32 %s15, 1
      %s21 = ssub.s32 %s15, 2
      %s22 = sadd.s32 %s15, 1
      %s24 = sadd.s32 %s23, 1
      %p27 = scmp.eq.s32.totalorder %s15, 1
      %p28 = scmp.ne.s32.totalorder %s23, %s25
      %p29 = scmp.eq.s32.totalorder %s15, 0
      %p30 = por %p28, %p29
      %p31 = scmp.ne.s32.totalorder %s23, %s25
      %p32 = scmp.eq.s32.totalorder %s20, 1
      %p33 = por %p31, %p32
      %p34 = scmp.ne.s32.totalorder %s25, %s26
      %p35 = scmp.eq.s32.totalorder %s20, 0
      %p36 = por %p34, %p35
      %p37 = scmp.ne.s32.totalorder %s25, %s26
      %p38 = scmp.eq.s32.totalorder %s21, 1
      %p39 = por %p37, %p38
      %p41 = scmp.ne.s32.totalorder %s26, %s40
      %p42 = scmp.eq.s32.totalorder %s21, 0
      %p43 = por %p41, %p42
      %s45 = sadd.s32 %s44, 1
      %p48 = scmp.eq.s32.totalorder %s15, 1
      %p49 = scmp.ne.s32.totalorder %s44, %s46
      %p50 = scmp.eq.s32.totalorder %s15, 0
      %p51 = por %p49, %p50
      %p52 = scmp.ne.s32.totalorder %s44, %s46
      %p53 = scmp.eq.s32.totalorder %s20, 1
      %p54 = por %p52, %p53
      %p55 = scmp.ne.s32.totalorder %s46, %s47
      %p56 = scmp.eq.s32.totalorder %s20, 0
      %p57 = por %p55, %p56
      %p58 = scmp.ne.s32.totalorder %s46, %s47
      %p59 = scmp.eq.s32.totalorder %s21, 1
      %p60 = por %p58, %p59
      %p62 = scmp.ne.s32.totalorder %s47, %s61
      %p63 = scmp.eq.s32.totalorder %s21, 0
      %p64 = por %p62, %p63
      %s66 = sadd.s32 %s65, 1
      %p69 = scmp.eq.s32.totalorder %s15, 1
      %p70 = scmp.ne.s32.totalorder %s65, %s67
      %p71 = scmp.eq.s32.totalorder %s15, 0
      %p72 = por %p70, %p71
      %p73 = scmp.ne.s32.totalorder %s65, %s67
      %p74 = scmp.eq.s32.totalorder %s20, 1
      %p75 = por %p73, %p74
      %p76 = scmp.ne.s32.totalorder %s67, %s68
      %p77 = scmp.eq.s32.totalorder %s20, 0
      %p78 = por %p76, %p77
      %p79 = scmp.ne.s32.totalorder %s67, %s68
      %p80 = scmp.eq.s32.totalorder %s21, 1
      %p81 = por %p79, %p80
      %p83 = scmp.ne.s32.totalorder %s68, %s82
      %p84 = scmp.eq.s32.totalorder %s21, 0
      %p85 = por %p83, %p84
      %s87 = sadd.s32 %s86, 1
      %p90 = scmp.eq.s32.totalorder %s15, 1
      %p91 = scmp.ne.s32.totalorder %s86, %s88
      %p92 = scmp.eq.s32.totalorder %s15, 0
      %p93 = por %p91, %p92
      %p94 = scmp.ne.s32.totalorder %s86, %s88
      %p95 = scmp.eq.s32.totalorder %s20, 1
      %p96 = por %p94, %p95
      %p97 = scmp.ne.s32.totalorder %s88, %s89
      %p98 = scmp.eq.s32.totalorder %s20, 0
      %p99 = por %p97, %p98
      %p100 = scmp.ne.s32.totalorder %s88, %s89
      %p101 = scmp.eq.s32.totalorder %s21, 1
      %p102 = por %p100, %p101
      %p104 = scmp.ne.s32.totalorder %s89, %s103
      %p105 = scmp.eq.s32.totalorder %s21, 0
      %p106 = por %p104, %p105
      %s108 = sadd.s32 %s107, 1
      %p111 = scmp.eq.s32.totalorder %s15, 1
      %p112 = scmp.ne.s32.totalorder %s107, %s109
      %p113 = scmp.eq.s32.totalorder %s15, 0
      %p114 = por %p112, %p113
      %p115 = scmp.ne.s32.totalorder %s107, %s109
      %p116 = scmp.eq.s32.totalorder %s20, 1
      %p117 = por %p115, %p116
      %p118 = scmp.ne.s32.totalorder %s109, %s110
      %p119 = scmp.eq.s32.totalorder %s20, 0
      %p120 = por %p118, %p119
      %p121 = scmp.ne.s32.totalorder %s109, %s110
      %p122 = scmp.eq.s32.totalorder %s21, 1
      %p123 = por %p121, %p122
      %p125 = scmp.ne.s32.totalorder %s110, %s124
      %p126 = scmp.eq.s32.totalorder %s21, 0
      %p127 = por %p125, %p126
      %s128 = ssub.s32 %s15, %s22
      %p129 = scmp.eq.s32.totalorder %s128, 0
      %s131 = sadd.s32 %s130, 1
      %s132 = scalar_select %p129, %s130, %s131
      %p135 = pneg %p129
      %p136 = scmp.eq.s32.totalorder %s15, 1
      %p137 = por %p135, %p136
      %p138 = scmp.ne.s32.totalorder %s130, %s133
      %p139 = scmp.eq.s32.totalorder %s15, 0
      %p140 = por %p138, %p139
      %p141 = scmp.ne.s32.totalorder %s130, %s133
      %p142 = scmp.eq.s32.totalorder %s20, 1
      %p143 = por %p141, %p142
      %p144 = scmp.ne.s32.totalorder %s133, %s134
      %p145 = scmp.eq.s32.totalorder %s20, 0
      %p146 = por %p144, %p145
      %p147 = scmp.ne.s32.totalorder %s133, %s134
      %p148 = scmp.eq.s32.totalorder %s21, 1
      %p149 = por %p147, %p148
      %p151 = scmp.ne.s32.totalorder %s134, %s150
      %p152 = scmp.eq.s32.totalorder %s21, 0
      %p153 = por %p151, %p152
      %s154 = ssub.s32 %s15, %s22
      %p155 = scmp.eq.s32.totalorder %s154, 0
      %s157 = sadd.s32 %s156, 1
      %s158 = scalar_select %p155, %s156, %s157
      %p161 = pneg %p155
      %p162 = scmp.eq.s32.totalorder %s15, 1
      %p163 = por %p161, %p162
      %p164 = scmp.ne.s32.totalorder %s156, %s159
      %p165 = scmp.eq.s32.totalorder %s15, 0
      %p166 = por %p164, %p165
      %p167 = scmp.ne.s32.totalorder %s156, %s159
      %p168 = scmp.eq.s32.totalorder %s20, 1
      %p169 = por %p167, %p168
      %p170 = scmp.ne.s32.totalorder %s159, %s160
      %p171 = scmp.eq.s32.totalorder %s20, 0
      %p172 = por %p170, %p171
      %p173 = scmp.ne.s32.totalorder %s159, %s160
      %p174 = scmp.eq.s32.totalorder %s21, 1
      %p175 = por %p173, %p174
      %p177 = scmp.ne.s32.totalorder %s160, %s176
      %p178 = scmp.eq.s32.totalorder %s21, 0
      %p179 = por %p177, %p178
      %s180 = ssub.s32 %s15, %s22
      %p181 = scmp.eq.s32.totalorder %s180, 0
      %s183 = sadd.s32 %s182, 1
      %s184 = scalar_select %p181, %s182, %s183
      %p187 = pneg %p181
      %p188 = scmp.eq.s32.totalorder %s15, 1
      %p189 = por %p187, %p188
      %p190 = scmp.ne.s32.totalorder %s182, %s185
      %p191 = scmp.eq.s32.totalorder %s15, 0
      %p192 = por %p190, %p191
      %p193 = scmp.ne.s32.totalorder %s182, %s185
      %p194 = scmp.eq.s32.totalorder %s20, 1
      %p195 = por %p193, %p194
      %p196 = scmp.ne.s32.totalorder %s185, %s186
      %p197 = scmp.eq.s32.totalorder %s20, 0
      %p198 = por %p196, %p197
      %p199 = scmp.ne.s32.totalorder %s185, %s186
      %p200 = scmp.eq.s32.totalorder %s21, 1
      %p201 = por %p199, %p200
      %p203 = scmp.ne.s32.totalorder %s186, %s202
      %p204 = scmp.eq.s32.totalorder %s21, 0
      %p205 = por %p203, %p204
      %p206 = scmp.le.s32.totalorder 1, %s15
      %p207 = scmp.lt.s32.totalorder %s15, 3
      %p208 = pnand %p206, %p207
      %p209 = pneg %p208
      // Predicated region
      $region9: #{ann_flowfield_forward.1} parent=5 // pred_check
        _
      $region10: #{ann_flowfield_forward.1} parent=5 // pred_check_branch
        %211 = sbr.rel (%p208) target = $region12
      $region11: #{ann_flowfield_forward.1} parent=5 // pred_region
        %s212 = ssub.s32 %s15, 1
        // Predicated region
        $region13: #{ann_flowfield_forward.1} parent=11 // pred_check
          %p213 = pneg %p36
        $region14: #{ann_flowfield_forward.1} parent=11 // pred_check_branch
          %215 = sbr.rel (%p213) target = $region16
        $region15: #{ann_flowfield_forward.1} parent=11 // pred_region
          _
        $region16: #{ann_flowfield_forward.1} parent=11 // pred_fallthru
          _
        // Predicated region
        $region17: #{ann_flowfield_forward.1} parent=11 // pred_check
          %p216 = pneg %p57
        $region18: #{ann_flowfield_forward.1} parent=11 // pred_check_branch
          %218 = sbr.rel (%p216) target = $region20
        $region19: #{ann_flowfield_forward.1} parent=11 // pred_region
          %220 = vsyncadd [#allocation3], 0
          %s221 = sshll.u32 %s1, 4
          %s222 = int_to_ptr.hbm [resolvable:$true] %s221
          %s223 = sshll.u32 [#allocation2], 4
          %s224 = int_to_ptr.vmem [resolvable:$true] %s223
          %229 = dma.hbm_to_vmem [thread:$0]  %s222, 256, %s224, [#allocation3], 128, 128, 8
        $region20: #{ann_flowfield_forward.1} parent=11 // pred_fallthru
          _
        // Predicated region
        $region21: #{ann_flowfield_forward.1} parent=11 // pred_check
          %p230 = pneg %p78
        $region22: #{ann_flowfield_forward.1} parent=11 // pred_check_branch
          %232 = sbr.rel (%p230) target = $region24
        $region23: #{ann_flowfield_forward.1} parent=11 // pred_region
          _
        $region24: #{ann_flowfield_forward.1} parent=11 // pred_fallthru
          _
        // Predicated region
        $region25: #{ann_flowfield_forward.1} parent=11 // pred_check
          %p233 = pneg %p99
        $region26: #{ann_flowfield_forward.1} parent=11 // pred_check_branch
          %235 = sbr.rel (%p233) target = $region28
        $region27: #{ann_flowfield_forward.1} parent=11 // pred_region
          %237 = vsyncadd [#allocation5], 0
          %s238 = sshll.u32 %s3, 4
          %s239 = int_to_ptr.hbm [resolvable:$true] %s238
          %s240 = sshll.u32 [#allocation4], 4
          %s241 = int_to_ptr.vmem [resolvable:$true] %s240
          %246 = dma.hbm_to_vmem [thread:$0]  %s239, 512, %s241, [#allocation5], 128, 128, 8
        $region28: #{ann_flowfield_forward.1} parent=11 // pred_fallthru
          _
        // Predicated region
        $region29: #{ann_flowfield_forward.1} parent=11 // pred_check
          %p247 = pneg %p120
        $region30: #{ann_flowfield_forward.1} parent=11 // pred_check_branch
          %249 = sbr.rel (%p247) target = $region32
        $region31: #{ann_flowfield_forward.1} parent=11 // pred_region
          _
        $region32: #{ann_flowfield_forward.1} parent=11 // pred_fallthru
          _
      $region12: #{ann_flowfield_forward.1} parent=5 // pred_fallthru
        _
      %p250 = scmp.lt.s32.totalorder %s15, 2
      // Predicated region
      $region33: #{ann_flowfield_forward.1} parent=5 // pred_check
        %p251 = pneg %p250
      $region34: #{ann_flowfield_forward.1} parent=5 // pred_check_branch
        %253 = sbr.rel (%p251) target = $region36
      $region35: #{ann_flowfield_forward.1} parent=5 // pred_region
        // Predicated region
        $region37: #{ann_flowfield_forward.1} parent=35 // pred_check
          %p254 = pneg %p140
        $region38: #{ann_flowfield_forward.1} parent=35 // pred_check_branch
          %256 = sbr.rel (%p254) target = $region40
        $region39: #{ann_flowfield_forward.1} parent=35 // pred_region
          %s257 = sand.u32 %s15, 1
          %s258 = scalar_lea.sflag [#allocation3], %s257
          %s259 = sand.u32 %s130, 1
          %s260 = smul.addr %s259, 1024
          %s261 = scalar_lea.vmem [#allocation6], %s260
          %s262 = smul.u32 64, %s15
          %264 = vsyncadd %s258, 0
          %s265 = smul.addr %s262, 4
          %s266 = scalar_lea.hbm %s5, %s265
          %s267 = sshll.u32 %s266, 4
          %s268 = int_to_ptr.hbm [resolvable:$true] %s267
          %s269 = sshll.u32 %s261, 4
          %s270 = int_to_ptr.vmem [resolvable:$true] %s269
          %275 = dma.hbm_to_vmem [thread:$0]  %s268, 16384, %s270, %s258, 8192, 4096, 256
        $region40: #{ann_flowfield_forward.1} parent=35 // pred_fallthru
          _
        // Predicated region
        $region41: #{ann_flowfield_forward.1} parent=35 // pred_check
          %p276 = pneg %p166
        $region42: #{ann_flowfield_forward.1} parent=35 // pred_check_branch
          %278 = sbr.rel (%p276) target = $region44
        $region43: #{ann_flowfield_forward.1} parent=35 // pred_region
          %s279 = sand.u32 %s15, 1
          %s280 = scalar_lea.sflag [#allocation3], %s279
          %s281 = sand.u32 %s156, 1
          %s282 = smul.addr %s281, 64
          %s283 = scalar_lea.vmem [#allocation7], %s282
          %s284 = smul.u32 64, %s15
          %286 = vsyncadd %s280, 0
          %s287 = scalar_lea.hbm %s6, %s284
          %s289 = sshll.u32 %s287, 4
          %s290 = int_to_ptr.hbm [resolvable:$true] %s289
          %s291 = sshll.u32 %s283, 4
          %s292 = int_to_ptr.vmem [resolvable:$true] %s291
          %294 = dma.hbm_to_vmem [thread:$0]  %s290, 1024, %s292, %s280
        $region44: #{ann_flowfield_forward.1} parent=35 // pred_fallthru
          _
      $region36: #{ann_flowfield_forward.1} parent=5 // pred_fallthru
        _
      %p295 = scmp.le.s32.totalorder 1, %s15
      %p296 = scmp.lt.s32.totalorder %s15, 3
      %p297 = pnand %p295, %p296
      %p298 = pneg %p297
      // Predicated region
      $region45: #{ann_flowfield_forward.1} parent=5 // pred_check
        _
      $region46: #{ann_flowfield_forward.1} parent=5 // pred_check_branch
        %300 = sbr.rel (%p297) target = $region48
      $region47: #{ann_flowfield_forward.1} parent=5 // pred_region
        %s301 = ssub.s32 %s15, 1
        // Predicated region
        $region49: #{ann_flowfield_forward.1} parent=47 // pred_check
          %p302 = pneg %p57
        $region50: #{ann_flowfield_forward.1} parent=47 // pred_check_branch
          %304 = sbr.rel (%p302) target = $region52
        $region51: #{ann_flowfield_forward.1} parent=47 // pred_region
          %306 = dma.done [#allocation3], 256
        $region52: #{ann_flowfield_forward.1} parent=47 // pred_fallthru
          _
        // Predicated region
        $region53: #{ann_flowfield_forward.1} parent=47 // pred_check
          %p307 = pneg %p99
        $region54: #{ann_flowfield_forward.1} parent=47 // pred_check_branch
          %309 = sbr.rel (%p307) target = $region56
        $region55: #{ann_flowfield_forward.1} parent=47 // pred_region
          %311 = dma.done [#allocation5], 512
        $region56: #{ann_flowfield_forward.1} parent=47 // pred_fallthru
          _
        %s312 = sand.u32 %s20, 1
        %s313 = scalar_lea.sflag [#allocation3], %s312
        %s314 = sand.u32 %s133, 1
        %s315 = smul.addr %s314, 1024
        %s316 = scalar_lea.vmem [#allocation6], %s315
        // Predicated region
        $region57: #{ann_flowfield_forward.1} parent=47 // pred_check
          %p317 = pneg %p146
        $region58: #{ann_flowfield_forward.1} parent=47 // pred_check_branch
          %319 = sbr.rel (%p317) target = $region60
        $region59: #{ann_flowfield_forward.1} parent=47 // pred_region
          %321 = dma.done %s313, 16384
        $region60: #{ann_flowfield_forward.1} parent=47 // pred_fallthru
          _
        %s322 = sand.u32 %s20, 1
        %s323 = scalar_lea.sflag [#allocation3], %s322
        %s324 = sand.u32 %s159, 1
        %s325 = smul.addr %s324, 64
        %s326 = scalar_lea.vmem [#allocation7], %s325
        // Predicated region
        $region61: #{ann_flowfield_forward.1} parent=47 // pred_check
          %p327 = pneg %p172
        $region62: #{ann_flowfield_forward.1} parent=47 // pred_check_branch
          %329 = sbr.rel (%p327) target = $region64
        $region63: #{ann_flowfield_forward.1} parent=47 // pred_region
          %331 = dma.done %s323, 1024
        $region64: #{ann_flowfield_forward.1} parent=47 // pred_fallthru
          _
        %p332 = pneg %p36
        %p333 = pneg %p33
        %p334 = pneg %p57
        %p335 = pneg %p54
        %p336 = pneg %p78
        %p337 = pneg %p75
        %p338 = pneg %p99
        %p339 = pneg %p96
        %p340 = pneg %p120
        %p341 = pneg %p117
        %s342 = sand.u32 %s20, 1
        %s343 = scalar_lea.sflag [#allocation3], %s342
        %s344 = sand.u32 %s133, 1
        %s345 = smul.addr %s344, 1024
        %s346 = scalar_lea.vmem [#allocation6], %s345
        %p347 = pneg %p146
        %p348 = pneg %p143
        %s349 = sand.u32 %s20, 1
        %s350 = scalar_lea.sflag [#allocation3], %s349
        %s351 = sand.u32 %s159, 1
        %s352 = smul.addr %s351, 64
        %s353 = scalar_lea.vmem [#allocation7], %s352
        %p354 = pneg %p172
        %p355 = pneg %p169
        %p356 = pneg %p198
        %p357 = pneg %p195
        %s358 = smul.u32 64, %s20
        %p359 = scmp.lt.s32.totalorder %s358, 127
        %s360 = scalar_select %p359, %s358, 127
        %s361 = smul.addr %s360, 8
        %s362 = scalar_lea.vmem %s7, %s361
        %s363 = smul.u32 64, %s20
        %s364 = smul.u32 64, %s20
        %s365 = smul.u32 64, %s20
        %p366 = scmp.lt.s32.totalorder %s365, 127
        %s367 = scalar_select %p366, %s365, 127
        %s368 = smul.addr %s367, 8
        %s369 = scalar_lea.vmem %s7, %s368
        %s370 = smul.u32 64, %s20
        %v372 = vld [vmem:[%s0] sm:$0xff]
        %v373 = vld [vmem:[#allocation2] sm:$0xff]
        %v374 = vld [vmem:[#allocation2 + $0x8] sm:$0xf]
        %v375 = vld [vmem:[%s2] sm:$0x1]
        %v377 = vperm.slane %v375, 0
        %vm379 = vcmask 97280
        %v381 = vsel %vm379, %v372, 0
        %vm383 = vcmask 1043456
        %v385 = vsel %vm383, %v374, 0
        %387 = vmatpush.msra.mxu0 0.0
        %388 = vmatpush.msra.mxu0 0.0
        %389 = vmatpush.msra.mxu0 0.0
        %390 = vmatpush.msra.mxu0 0.0
        %391 = vmatpush.msra.mxu0 0.0
        %392 = vmatpush.msra.mxu0 0.0
        %393 = vmatpush.msra.mxu0 0.0
        %394 = vmatpush.msra.mxu0 0.0
        %395 = vmatpush.msra.mxu0 0.0
        %396 = vmatpush.msra.mxu0 0.0
        %397 = vmatpush.msra.mxu0 0.0
        %398 = vmatpush.msra.mxu0 0.0
        %399 = vmatpush.msra.mxu0 0.0
        %400 = vmatpush.msra.mxu0 0.0
        %401 = vmatpush.msra.mxu0 %v385
        %402 = vmatpush.msra.mxu0 %v373
        %403 = vmatmul.f32.gmra.mxu0 %v381
        %v404 = vpop.f32.mrf.mxu0
        %v405 = vadd.f32 %v377, %v404
        %406 = vdwg.mxu0
        %vm407 = vcmp.ge.f32.partialorder %v405, 0.0
        %v408 = vmul.f32 %v405, 0.2
        %v409 = vsel %vm407, %v405, %v408
        %v410 = vld [vmem:[#allocation4] sm:$0xff]
        %v411 = vld [vmem:[#allocation4 + $0x8] sm:$0xff]
        %v412 = vld [vmem:[#allocation4 + $0x10] sm:$0xff]
        %v413 = vld [vmem:[#allocation4 + $0x18] sm:$0xff]
        %v414 = vld [vmem:[%s4] sm:$0x1]
        %v416 = vperm.slane %v414, 0
        %vm418 = vcmask 261120
        %v420 = vsel %vm418, %v409, 0
        %422 = vmatpush.msra.mxu0 0.0
        %423 = vmatpush.msra.mxu0 0.0
        %424 = vmatpush.msra.mxu0 0.0
        %425 = vmatpush.msra.mxu0 0.0
        %426 = vmatpush.msra.mxu0 0.0
        %427 = vmatpush.msra.mxu0 0.0
        %428 = vmatpush.msra.mxu0 0.0
        %429 = vmatpush.msra.mxu0 0.0
        %430 = vmatpush.msra.mxu0 0.0
        %431 = vmatpush.msra.mxu0 0.0
        %432 = vmatpush.msra.mxu0 0.0
        %433 = vmatpush.msra.mxu0 0.0
        %434 = vmatpush.msra.mxu0 %v413
        %435 = vmatpush.msra.mxu0 %v412
        %436 = vmatpush.msra.mxu0 %v411
        %437 = vmatpush.msra.mxu0 %v410
        %438 = vmatmul.f32.gmra.mxu0 %v420
        %v439 = vpop.f32.mrf.mxu0
        %v440 = vadd.f32 %v416, %v439
        %441 = vdwg.mxu0
        %vm442 = vcmp.ge.f32.partialorder %v440, 0.0
        %v443 = vmul.f32 %v440, 0.2
        %v444 = vsel %vm442, %v440, %v443
        %v445 = vpack.c.bf16 %v444, %v444
        %v446 = vld [vmem:[%s316] sm:$0xff]
        %v447 = vld [vmem:[%s316 + $0x8] sm:$0xff]
        %v448 = vld [vmem:[%s316 + $0x10] sm:$0xff]
        %v449 = vld [vmem:[%s316 + $0x18] sm:$0xff]
        %v450 = vld [vmem:[%s316 + $0x20] sm:$0xff]
        %v451 = vld [vmem:[%s316 + $0x28] sm:$0xff]
        %v452 = vld [vmem:[%s316 + $0x30] sm:$0xff]
        %v453 = vld [vmem:[%s316 + $0x38] sm:$0xff]
        %v454 = vld [vmem:[%s316 + $0x40] sm:$0xff]
        %v455 = vld [vmem:[%s316 + $0x48] sm:$0xff]
        %v456 = vld [vmem:[%s316 + $0x50] sm:$0xff]
        %v457 = vld [vmem:[%s316 + $0x58] sm:$0xff]
        %v458 = vld [vmem:[%s316 + $0x60] sm:$0xff]
        %v459 = vld [vmem:[%s316 + $0x68] sm:$0xff]
        %v460 = vld [vmem:[%s316 + $0x70] sm:$0xff]
        %v461 = vld [vmem:[%s316 + $0x78] sm:$0xff]
        %v462 = vld [vmem:[%s316 + $0x80] sm:$0xff]
        %v463 = vld [vmem:[%s316 + $0x88] sm:$0xff]
        %v464 = vld [vmem:[%s316 + $0x90] sm:$0xff]
        %v465 = vld [vmem:[%s316 + $0x98] sm:$0xff]
        %v466 = vld [vmem:[%s316 + $0xa0] sm:$0xff]
        %v467 = vld [vmem:[%s316 + $0xa8] sm:$0xff]
        %v468 = vld [vmem:[%s316 + $0xb0] sm:$0xff]
        %v469 = vld [vmem:[%s316 + $0xb8] sm:$0xff]
        %v470 = vld [vmem:[%s316 + $0xc0] sm:$0xff]
        %v471 = vld [vmem:[%s316 + $0xc8] sm:$0xff]
        %v472 = vld [vmem:[%s316 + $0xd0] sm:$0xff]
        %v473 = vld [vmem:[%s316 + $0xd8] sm:$0xff]
        %v474 = vld [vmem:[%s316 + $0xe0] sm:$0xff]
        %v475 = vld [vmem:[%s316 + $0xe8] sm:$0xff]
        %v476 = vld [vmem:[%s316 + $0xf0] sm:$0xff]
        %v477 = vld [vmem:[%s316 + $0xf8] sm:$0xff]
        %v478 = vld [vmem:[%s316 + $0x100] sm:$0xff]
        %v479 = vld [vmem:[%s316 + $0x108] sm:$0xff]
        %v480 = vld [vmem:[%s316 + $0x110] sm:$0xff]
        %v481 = vld [vmem:[%s316 + $0x118] sm:$0xff]
        %v482 = vld [vmem:[%s316 + $0x120] sm:$0xff]
        %v483 = vld [vmem:[%s316 + $0x128] sm:$0xff]
        %v484 = vld [vmem:[%s316 + $0x130] sm:$0xff]
        %v485 = vld [vmem:[%s316 + $0x138] sm:$0xff]
        %v486 = vld [vmem:[%s316 + $0x140] sm:$0xff]
        %v487 = vld [vmem:[%s316 + $0x148] sm:$0xff]
        %v488 = vld [vmem:[%s316 + $0x150] sm:$0xff]
        %v489 = vld [vmem:[%s316 + $0x158] sm:$0xff]
        %v490 = vld [vmem:[%s316 + $0x160] sm:$0xff]
        %v491 = vld [vmem:[%s316 + $0x168] sm:$0xff]
        %v492 = vld [vmem:[%s316 + $0x170] sm:$0xff]
        %v493 = vld [vmem:[%s316 + $0x178] sm:$0xff]
        %v494 = vld [vmem:[%s316 + $0x180] sm:$0xff]
        %v495 = vld [vmem:[%s316 + $0x188] sm:$0xff]
        %v496 = vld [vmem:[%s316 + $0x190] sm:$0xff]
        %v497 = vld [vmem:[%s316 + $0x198] sm:$0xff]
        %v498 = vld [vmem:[%s316 + $0x1a0] sm:$0xff]
        %v499 = vld [vmem:[%s316 + $0x1a8] sm:$0xff]
        %v500 = vld [vmem:[%s316 + $0x1b0] sm:$0xff]
        %v501 = vld [vmem:[%s316 + $0x1b8] sm:$0xff]
        %v502 = vld [vmem:[%s316 + $0x1c0] sm:$0xff]
        %v503 = vld [vmem:[%s316 + $0x1c8] sm:$0xff]
        %v504 = vld [vmem:[%s316 + $0x1d0] sm:$0xff]
        %v505 = vld [vmem:[%s316 + $0x1d8] sm:$0xff]
        %v506 = vld [vmem:[%s316 + $0x1e0] sm:$0xff]
        %v507 = vld [vmem:[%s316 + $0x1e8] sm:$0xff]
        %v508 = vld [vmem:[%s316 + $0x1f0] sm:$0xff]
        %v509 = vld [vmem:[%s316 + $0x1f8] sm:$0xff]
        %v510 = vld [vmem:[%s316 + $0x200] sm:$0xff]
        %v511 = vld [vmem:[%s316 + $0x208] sm:$0xff]
        %v512 = vld [vmem:[%s316 + $0x210] sm:$0xff]
        %v513 = vld [vmem:[%s316 + $0x218] sm:$0xff]
        %v514 = vld [vmem:[%s316 + $0x220] sm:$0xff]
        %v515 = vld [vmem:[%s316 + $0x228] sm:$0xff]
        %v516 = vld [vmem:[%s316 + $0x230] sm:$0xff]
        %v517 = vld [vmem:[%s316 + $0x238] sm:$0xff]
        %v518 = vld [vmem:[%s316 + $0x240] sm:$0xff]
        %v519 = vld [vmem:[%s316 + $0x248] sm:$0xff]
        %v520 = vld [vmem:[%s316 + $0x250] sm:$0xff]
        %v521 = vld [vmem:[%s316 + $0x258] sm:$0xff]
        %v522 = vld [vmem:[%s316 + $0x260] sm:$0xff]
        %v523 = vld [vmem:[%s316 + $0x268] sm:$0xff]
        %v524 = vld [vmem:[%s316 + $0x270] sm:$0xff]
        %v525 = vld [vmem:[%s316 + $0x278] sm:$0xff]
        %v526 = vld [vmem:[%s316 + $0x280] sm:$0xff]
        %v527 = vld [vmem:[%s316 + $0x288] sm:$0xff]
        %v528 = vld [vmem:[%s316 + $0x290] sm:$0xff]
        %v529 = vld [vmem:[%s316 + $0x298] sm:$0xff]
        %v530 = vld [vmem:[%s316 + $0x2a0] sm:$0xff]
        %v531 = vld [vmem:[%s316 + $0x2a8] sm:$0xff]
        %v532 = vld [vmem:[%s316 + $0x2b0] sm:$0xff]
        %v533 = vld [vmem:[%s316 + $0x2b8] sm:$0xff]
        %v534 = vld [vmem:[%s316 + $0x2c0] sm:$0xff]
        %v535 = vld [vmem:[%s316 + $0x2c8] sm:$0xff]
        %v536 = vld [vmem:[%s316 + $0x2d0] sm:$0xff]
        %v537 = vld [vmem:[%s316 + $0x2d8] sm:$0xff]
        %v538 = vld [vmem:[%s316 + $0x2e0] sm:$0xff]
        %v539 = vld [vmem:[%s316 + $0x2e8] sm:$0xff]
        %v540 = vld [vmem:[%s316 + $0x2f0] sm:$0xff]
        %v541 = vld [vmem:[%s316 + $0x2f8] sm:$0xff]
        %v542 = vld [vmem:[%s316 + $0x300] sm:$0xff]
        %v543 = vld [vmem:[%s316 + $0x308] sm:$0xff]
        %v544 = vld [vmem:[%s316 + $0x310] sm:$0xff]
        %v545 = vld [vmem:[%s316 + $0x318] sm:$0xff]
        %v546 = vld [vmem:[%s316 + $0x320] sm:$0xff]
        %v547 = vld [vmem:[%s316 + $0x328] sm:$0xff]
        %v548 = vld [vmem:[%s316 + $0x330] sm:$0xff]
        %v549 = vld [vmem:[%s316 + $0x338] sm:$0xff]
        %v550 = vld [vmem:[%s316 + $0x340] sm:$0xff]
        %v551 = vld [vmem:[%s316 + $0x348] sm:$0xff]
        %v552 = vld [vmem:[%s316 + $0x350] sm:$0xff]
        %v553 = vld [vmem:[%s316 + $0x358] sm:$0xff]
        %v554 = vld [vmem:[%s316 + $0x360] sm:$0xff]
        %v555 = vld [vmem:[%s316 + $0x368] sm:$0xff]
        %v556 = vld [vmem:[%s316 + $0x370] sm:$0xff]
        %v557 = vld [vmem:[%s316 + $0x378] sm:$0xff]
        %v558 = vld [vmem:[%s316 + $0x380] sm:$0xff]
        %v559 = vld [vmem:[%s316 + $0x388] sm:$0xff]
        %v560 = vld [vmem:[%s316 + $0x390] sm:$0xff]
        %v561 = vld [vmem:[%s316 + $0x398] sm:$0xff]
        %v562 = vld [vmem:[%s316 + $0x3a0] sm:$0xff]
        %v563 = vld [vmem:[%s316 + $0x3a8] sm:$0xff]
        %v564 = vld [vmem:[%s316 + $0x3b0] sm:$0xff]
        %v565 = vld [vmem:[%s316 + $0x3b8] sm:$0xff]
        %v566 = vld [vmem:[%s316 + $0x3c0] sm:$0xff]
        %v567 = vld [vmem:[%s316 + $0x3c8] sm:$0xff]
        %v568 = vld [vmem:[%s316 + $0x3d0] sm:$0xff]
        %v569 = vld [vmem:[%s316 + $0x3d8] sm:$0xff]
        %v570 = vld [vmem:[%s316 + $0x3e0] sm:$0xff]
        %v571 = vld [vmem:[%s316 + $0x3e8] sm:$0xff]
        %v572 = vld [vmem:[%s316 + $0x3f0] sm:$0xff]
        %v573 = vld [vmem:[%s316 + $0x3f8] sm:$0xff]
        %v574 = vld [vmem:[%s326] sm:$0xff]
        %v575 = vld [vmem:[%s326 + $0x8] sm:$0xff]
        %v576 = vld [vmem:[%s326 + $0x10] sm:$0xff]
        %v577 = vld [vmem:[%s326 + $0x18] sm:$0xff]
        %v578 = vld [vmem:[%s326 + $0x20] sm:$0xff]
        %v579 = vld [vmem:[%s326 + $0x28] sm:$0xff]
        %v580 = vld [vmem:[%s326 + $0x30] sm:$0xff]
        %v581 = vld [vmem:[%s326 + $0x38] sm:$0xff]
        %v590 = vperm.slane %v574, 0
        %v591 = vperm.slane %v574, 1
        %v592 = vperm.slane %v574, 2
        %v593 = vperm.slane %v574, 3
        %v594 = vperm.slane %v574, 4
        %v595 = vperm.slane %v574, 5
        %v596 = vperm.slane %v574, 6
        %v597 = vperm.slane %v574, 7
        %v598 = vperm.slane %v575, 0
        %v599 = vperm.slane %v575, 1
        %v600 = vperm.slane %v575, 2
        %v601 = vperm.slane %v575, 3
        %v602 = vperm.slane %v575, 4
        %v603 = vperm.slane %v575, 5
        %v604 = vperm.slane %v575, 6
        %v605 = vperm.slane %v575, 7
        %v606 = vperm.slane %v576, 0
        %v607 = vperm.slane %v576, 1
        %v608 = vperm.slane %v576, 2
        %v609 = vperm.slane %v576, 3
        %v610 = vperm.slane %v576, 4
        %v611 = vperm.slane %v576, 5
        %v612 = vperm.slane %v576, 6
        %v613 = vperm.slane %v576, 7
        %v614 = vperm.slane %v577, 0
        %v615 = vperm.slane %v577, 1
        %v616 = vperm.slane %v577, 2
        %v617 = vperm.slane %v577, 3
        %v618 = vperm.slane %v577, 4
        %v619 = vperm.slane %v577, 5
        %v620 = vperm.slane %v577, 6
        %v621 = vperm.slane %v577, 7
        %v622 = vperm.slane %v578, 0
        %v623 = vperm.slane %v578, 1
        %v624 = vperm.slane %v578, 2
        %v625 = vperm.slane %v578, 3
        %v626 = vperm.slane %v578, 4
        %v627 = vperm.slane %v578, 5
        %v628 = vperm.slane %v578, 6
        %v629 = vperm.slane %v578, 7
        %v630 = vperm.slane %v579, 0
        %v631 = vperm.slane %v579, 1
        %v632 = vperm.slane %v579, 2
        %v633 = vperm.slane %v579, 3
        %v634 = vperm.slane %v579, 4
        %v635 = vperm.slane %v579, 5
        %v636 = vperm.slane %v579, 6
        %v637 = vperm.slane %v579, 7
        %v638 = vperm.slane %v580, 0
        %v639 = vperm.slane %v580, 1
        %v640 = vperm.slane %v580, 2
        %v641 = vperm.slane %v580, 3
        %v642 = vperm.slane %v580, 4
        %v643 = vperm.slane %v580, 5
        %v644 = vperm.slane %v580, 6
        %v645 = vperm.slane %v580, 7
        %v646 = vperm.slane %v581, 0
        %v647 = vperm.slane %v581, 1
        %v648 = vperm.slane %v581, 2
        %v649 = vperm.slane %v581, 3
        %v650 = vperm.slane %v581, 4
        %v651 = vperm.slane %v581, 5
        %v652 = vperm.slane %v581, 6
        %v653 = vperm.slane %v581, 7
        %v846 = vunpack.c.l.b16 %v446
        %v847 = vunpack.c.h.b16 %v446
        %v848 = vunpack.c.l.b16 %v447
        %v849 = vunpack.c.h.b16 %v447
        %v850 = vunpack.c.l.b16 %v448
        %v851 = vunpack.c.h.b16 %v448
        %v852 = vunpack.c.l.b16 %v449
        %v853 = vunpack.c.h.b16 %v449
        %v854 = vunpack.c.l.b16 %v450
        %v855 = vunpack.c.h.b16 %v450
        %v856 = vunpack.c.l.b16 %v451
        %v857 = vunpack.c.h.b16 %v451
        %v858 = vunpack.c.l.b16 %v452
        %v859 = vunpack.c.h.b16 %v452
        %v860 = vunpack.c.l.b16 %v453
        %v861 = vunpack.c.h.b16 %v453
        %v862 = vunpack.c.l.b16 %v454
        %v863 = vunpack.c.h.b16 %v454
        %v864 = vunpack.c.l.b16 %v455
        %v865 = vunpack.c.h.b16 %v455
        %v866 = vunpack.c.l.b16 %v456
        %v867 = vunpack.c.h.b16 %v456
        %v868 = vunpack.c.l.b16 %v457
        %v869 = vunpack.c.h.b16 %v457
        %v870 = vunpack.c.l.b16 %v458
        %v871 = vunpack.c.h.b16 %v458
        %v872 = vunpack.c.l.b16 %v459
        %v873 = vunpack.c.h.b16 %v459
        %v874 = vunpack.c.l.b16 %v460
        %v875 = vunpack.c.h.b16 %v460
        %v876 = vunpack.c.l.b16 %v461
        %v877 = vunpack.c.h.b16 %v461
        %v878 = vunpack.c.l.b16 %v462
        %v879 = vunpack.c.h.b16 %v462
        %v880 = vunpack.c.l.b16 %v463
        %v881 = vunpack.c.h.b16 %v463
        %v882 = vunpack.c.l.b16 %v464
        %v883 = vunpack.c.h.b16 %v464
        %v884 = vunpack.c.l.b16 %v465
        %v885 = vunpack.c.h.b16 %v465
        %v886 = vunpack.c.l.b16 %v466
        %v887 = vunpack.c.h.b16 %v466
        %v888 = vunpack.c.l.b16 %v467
        %v889 = vunpack.c.h.b16 %v467
        %v890 = vunpack.c.l.b16 %v468
        %v891 = vunpack.c.h.b16 %v468
        %v892 = vunpack.c.l.b16 %v469
        %v893 = vunpack.c.h.b16 %v469
        %v894 = vunpack.c.l.b16 %v470
        %v895 = vunpack.c.h.b16 %v470
        %v896 = vunpack.c.l.b16 %v471
        %v897 = vunpack.c.h.b16 %v471
        %v898 = vunpack.c.l.b16 %v472
        %v899 = vunpack.c.h.b16 %v472
        %v900 = vunpack.c.l.b16 %v473
        %v901 = vunpack.c.h.b16 %v473
        %v902 = vunpack.c.l.b16 %v474
        %v903 = vunpack.c.h.b16 %v474
        %v904 = vunpack.c.l.b16 %v475
        %v905 = vunpack.c.h.b16 %v475
        %v906 = vunpack.c.l.b16 %v476
        %v907 = vunpack.c.h.b16 %v476
        %v908 = vunpack.c.l.b16 %v477
        %v909 = vunpack.c.h.b16 %v477
        %v910 = vunpack.c.l.b16 %v478
        %v911 = vunpack.c.h.b16 %v478
        %v912 = vunpack.c.l.b16 %v479
        %v913 = vunpack.c.h.b16 %v479
        %v914 = vunpack.c.l.b16 %v480
        %v915 = vunpack.c.h.b16 %v480
        %v916 = vunpack.c.l.b16 %v481
        %v917 = vunpack.c.h.b16 %v481
        %v918 = vunpack.c.l.b16 %v482
        %v919 = vunpack.c.h.b16 %v482
        %v920 = vunpack.c.l.b16 %v483
        %v921 = vunpack.c.h.b16 %v483
        %v922 = vunpack.c.l.b16 %v484
        %v923 = vunpack.c.h.b16 %v484
        %v924 = vunpack.c.l.b16 %v485
        %v925 = vunpack.c.h.b16 %v485
        %v926 = vunpack.c.l.b16 %v486
        %v927 = vunpack.c.h.b16 %v486
        %v928 = vunpack.c.l.b16 %v487
        %v929 = vunpack.c.h.b16 %v487
        %v930 = vunpack.c.l.b16 %v488
        %v931 = vunpack.c.h.b16 %v488
        %v932 = vunpack.c.l.b16 %v489
        %v933 = vunpack.c.h.b16 %v489
        %v934 = vunpack.c.l.b16 %v490
        %v935 = vunpack.c.h.b16 %v490
        %v936 = vunpack.c.l.b16 %v491
        %v937 = vunpack.c.h.b16 %v491
        %v938 = vunpack.c.l.b16 %v492
        %v939 = vunpack.c.h.b16 %v492
        %v940 = vunpack.c.l.b16 %v493
        %v941 = vunpack.c.h.b16 %v493
        %v942 = vunpack.c.l.b16 %v494
        %v943 = vunpack.c.h.b16 %v494
        %v944 = vunpack.c.l.b16 %v495
        %v945 = vunpack.c.h.b16 %v495
        %v946 = vunpack.c.l.b16 %v496
        %v947 = vunpack.c.h.b16 %v496
        %v948 = vunpack.c.l.b16 %v497
        %v949 = vunpack.c.h.b16 %v497
        %v950 = vunpack.c.l.b16 %v498
        %v951 = vunpack.c.h.b16 %v498
        %v952 = vunpack.c.l.b16 %v499
        %v953 = vunpack.c.h.b16 %v499
        %v954 = vunpack.c.l.b16 %v500
        %v955 = vunpack.c.h.b16 %v500
        %v956 = vunpack.c.l.b16 %v501
        %v957 = vunpack.c.h.b16 %v501
        %v958 = vunpack.c.l.b16 %v502
        %v959 = vunpack.c.h.b16 %v502
        %v960 = vunpack.c.l.b16 %v503
        %v961 = vunpack.c.h.b16 %v503
        %v962 = vunpack.c.l.b16 %v504
        %v963 = vunpack.c.h.b16 %v504
        %v964 = vunpack.c.l.b16 %v505
        %v965 = vunpack.c.h.b16 %v505
        %v966 = vunpack.c.l.b16 %v506
        %v967 = vunpack.c.h.b16 %v506
        %v968 = vunpack.c.l.b16 %v507
        %v969 = vunpack.c.h.b16 %v507
        %v970 = vunpack.c.l.b16 %v508
        %v971 = vunpack.c.h.b16 %v508
        %v972 = vunpack.c.l.b16 %v509
        %v973 = vunpack.c.h.b16 %v509
        %v974 = vunpack.c.l.b16 %v510
        %v975 = vunpack.c.h.b16 %v510
        %v976 = vunpack.c.l.b16 %v511
        %v977 = vunpack.c.h.b16 %v511
        %v978 = vunpack.c.l.b16 %v512
        %v979 = vunpack.c.h.b16 %v512
        %v980 = vunpack.c.l.b16 %v513
        %v981 = vunpack.c.h.b16 %v513
        %v982 = vunpack.c.l.b16 %v514
        %v983 = vunpack.c.h.b16 %v514
        %v984 = vunpack.c.l.b16 %v515
        %v985 = vunpack.c.h.b16 %v515
        %v986 = vunpack.c.l.b16 %v516
        %v987 = vunpack.c.h.b16 %v516
        %v988 = vunpack.c.l.b16 %v517
        %v989 = vunpack.c.h.b16 %v517
        %v990 = vunpack.c.l.b16 %v518
        %v991 = vunpack.c.h.b16 %v518
        %v992 = vunpack.c.l.b16 %v519
        %v993 = vunpack.c.h.b16 %v519
        %v994 = vunpack.c.l.b16 %v520
        %v995 = vunpack.c.h.b16 %v520
        %v996 = vunpack.c.l.b16 %v521
        %v997 = vunpack.c.h.b16 %v521
        %v998 = vunpack.c.l.b16 %v522
        %v999 = vunpack.c.h.b16 %v522
        %v1000 = vunpack.c.l.b16 %v523
        %v1001 = vunpack.c.h.b16 %v523
        %v1002 = vunpack.c.l.b16 %v524
        %v1003 = vunpack.c.h.b16 %v524
        %v1004 = vunpack.c.l.b16 %v525
        %v1005 = vunpack.c.h.b16 %v525
        %v1006 = vunpack.c.l.b16 %v526
        %v1007 = vunpack.c.h.b16 %v526
        %v1008 = vunpack.c.l.b16 %v527
        %v1009 = vunpack.c.h.b16 %v527
        %v1010 = vunpack.c.l.b16 %v528
        %v1011 = vunpack.c.h.b16 %v528
        %v1012 = vunpack.c.l.b16 %v529
        %v1013 = vunpack.c.h.b16 %v529
        %v1014 = vunpack.c.l.b16 %v530
        %v1015 = vunpack.c.h.b16 %v530
        %v1016 = vunpack.c.l.b16 %v531
        %v1017 = vunpack.c.h.b16 %v531
        %v1018 = vunpack.c.l.b16 %v532
        %v1019 = vunpack.c.h.b16 %v532
        %v1020 = vunpack.c.l.b16 %v533
        %v1021 = vunpack.c.h.b16 %v533
        %v1022 = vunpack.c.l.b16 %v534
        %v1023 = vunpack.c.h.b16 %v534
        %v1024 = vunpack.c.l.b16 %v535
        %v1025 = vunpack.c.h.b16 %v535
        %v1026 = vunpack.c.l.b16 %v536
        %v1027 = vunpack.c.h.b16 %v536
        %v1028 = vunpack.c.l.b16 %v537
        %v1029 = vunpack.c.h.b16 %v537
        %v1030 = vunpack.c.l.b16 %v538
        %v1031 = vunpack.c.h.b16 %v538
        %v1032 = vunpack.c.l.b16 %v539
        %v1033 = vunpack.c.h.b16 %v539
        %v1034 = vunpack.c.l.b16 %v540
        %v1035 = vunpack.c.h.b16 %v540
        %v1036 = vunpack.c.l.b16 %v541
        %v1037 = vunpack.c.h.b16 %v541
        %v1038 = vunpack.c.l.b16 %v542
        %v1039 = vunpack.c.h.b16 %v542
        %v1040 = vunpack.c.l.b16 %v543
        %v1041 = vunpack.c.h.b16 %v543
        %v1042 = vunpack.c.l.b16 %v544
        %v1043 = vunpack.c.h.b16 %v544
        %v1044 = vunpack.c.l.b16 %v545
        %v1045 = vunpack.c.h.b16 %v545
        %v1046 = vunpack.c.l.b16 %v546
        %v1047 = vunpack.c.h.b16 %v546
        %v1048 = vunpack.c.l.b16 %v547
        %v1049 = vunpack.c.h.b16 %v547
        %v1050 = vunpack.c.l.b16 %v548
        %v1051 = vunpack.c.h.b16 %v548
        %v1052 = vunpack.c.l.b16 %v549
        %v1053 = vunpack.c.h.b16 %v549
        %v1054 = vunpack.c.l.b16 %v550
        %v1055 = vunpack.c.h.b16 %v550
        %v1056 = vunpack.c.l.b16 %v551
        %v1057 = vunpack.c.h.b16 %v551
        %v1058 = vunpack.c.l.b16 %v552
        %v1059 = vunpack.c.h.b16 %v552
        %v1060 = vunpack.c.l.b16 %v553
        %v1061 = vunpack.c.h.b16 %v553
        %v1062 = vunpack.c.l.b16 %v554
        %v1063 = vunpack.c.h.b16 %v554
        %v1064 = vunpack.c.l.b16 %v555
        %v1065 = vunpack.c.h.b16 %v555
        %v1066 = vunpack.c.l.b16 %v556
        %v1067 = vunpack.c.h.b16 %v556
        %v1068 = vunpack.c.l.b16 %v557
        %v1069 = vunpack.c.h.b16 %v557
        %v1070 = vunpack.c.l.b16 %v558
        %v1071 = vunpack.c.h.b16 %v558
        %v1072 = vunpack.c.l.b16 %v559
        %v1073 = vunpack.c.h.b16 %v559
        %v1074 = vunpack.c.l.b16 %v560
        %v1075 = vunpack.c.h.b16 %v560
        %v1076 = vunpack.c.l.b16 %v561
        %v1077 = vunpack.c.h.b16 %v561
        %v1078 = vunpack.c.l.b16 %v562
        %v1079 = vunpack.c.h.b16 %v562
        %v1080 = vunpack.c.l.b16 %v563
        %v1081 = vunpack.c.h.b16 %v563
        %v1082 = vunpack.c.l.b16 %v564
        %v1083 = vunpack.c.h.b16 %v564
        %v1084 = vunpack.c.l.b16 %v565
        %v1085 = vunpack.c.h.b16 %v565
        %v1086 = vunpack.c.l.b16 %v566
        %v1087 = vunpack.c.h.b16 %v566
        %v1088 = vunpack.c.l.b16 %v567
        %v1089 = vunpack.c.h.b16 %v567
        %v1090 = vunpack.c.l.b16 %v568
        %v1091 = vunpack.c.h.b16 %v568
        %v1092 = vunpack.c.l.b16 %v569
        %v1093 = vunpack.c.h.b16 %v569
        %v1094 = vunpack.c.l.b16 %v570
        %v1095 = vunpack.c.h.b16 %v570
        %v1096 = vunpack.c.l.b16 %v571
        %v1097 = vunpack.c.h.b16 %v571
        %v1098 = vunpack.c.l.b16 %v572
        %v1099 = vunpack.c.h.b16 %v572
        %v1100 = vunpack.c.l.b16 %v573
        %v1101 = vunpack.c.h.b16 %v573
        %v1102 = vpack.c.b16 %v910, %v846
        %v1103 = vpack.c.b16 %v911, %v847
        %v1104 = vpack.c.b16 %v912, %v848
        %v1105 = vpack.c.b16 %v913, %v849
        %v1106 = vpack.c.b16 %v914, %v850
        %v1107 = vpack.c.b16 %v915, %v851
        %v1108 = vpack.c.b16 %v916, %v852
        %v1109 = vpack.c.b16 %v917, %v853
        %v1110 = vpack.c.b16 %v918, %v854
        %v1111 = vpack.c.b16 %v919, %v855
        %v1112 = vpack.c.b16 %v920, %v856
        %v1113 = vpack.c.b16 %v921, %v857
        %v1114 = vpack.c.b16 %v922, %v858
        %v1115 = vpack.c.b16 %v923, %v859
        %v1116 = vpack.c.b16 %v924, %v860
        %v1117 = vpack.c.b16 %v925, %v861
        %v1118 = vpack.c.b16 %v926, %v862
        %v1119 = vpack.c.b16 %v927, %v863
        %v1120 = vpack.c.b16 %v928, %v864
        %v1121 = vpack.c.b16 %v929, %v865
        %v1122 = vpack.c.b16 %v930, %v866
        %v1123 = vpack.c.b16 %v931, %v867
        %v1124 = vpack.c.b16 %v932, %v868
        %v1125 = vpack.c.b16 %v933, %v869
        %v1126 = vpack.c.b16 %v934, %v870
        %v1127 = vpack.c.b16 %v935, %v871
        %v1128 = vpack.c.b16 %v936, %v872
        %v1129 = vpack.c.b16 %v937, %v873
        %v1130 = vpack.c.b16 %v938, %v874
        %v1131 = vpack.c.b16 %v939, %v875
        %v1132 = vpack.c.b16 %v940, %v876
        %v1133 = vpack.c.b16 %v941, %v877
        %v1134 = vpack.c.b16 %v942, %v878
        %v1135 = vpack.c.b16 %v943, %v879
        %v1136 = vpack.c.b16 %v944, %v880
        %v1137 = vpack.c.b16 %v945, %v881
        %v1138 = vpack.c.b16 %v946, %v882
        %v1139 = vpack.c.b16 %v947, %v883
        %v1140 = vpack.c.b16 %v948, %v884
        %v1141 = vpack.c.b16 %v949, %v885
        %v1142 = vpack.c.b16 %v950, %v886
        %v1143 = vpack.c.b16 %v951, %v887
        %v1144 = vpack.c.b16 %v952, %v888
        %v1145 = vpack.c.b16 %v953, %v889
        %v1146 = vpack.c.b16 %v954, %v890
        %v1147 = vpack.c.b16 %v955, %v891
        %v1148 = vpack.c.b16 %v956, %v892
        %v1149 = vpack.c.b16 %v957, %v893
        %v1150 = vpack.c.b16 %v958, %v894
        %v1151 = vpack.c.b16 %v959, %v895
        %v1152 = vpack.c.b16 %v960, %v896
        %v1153 = vpack.c.b16 %v961, %v897
        %v1154 = vpack.c.b16 %v962, %v898
        %v1155 = vpack.c.b16 %v963, %v899
        %v1156 = vpack.c.b16 %v964, %v900
        %v1157 = vpack.c.b16 %v965, %v901
        %v1158 = vpack.c.b16 %v966, %v902
        %v1159 = vpack.c.b16 %v967, %v903
        %v1160 = vpack.c.b16 %v968, %v904
        %v1161 = vpack.c.b16 %v969, %v905
        %v1162 = vpack.c.b16 %v970, %v906
        %v1163 = vpack.c.b16 %v971, %v907
        %v1164 = vpack.c.b16 %v972, %v908
        %v1165 = vpack.c.b16 %v973, %v909
        %v1166 = vpack.c.b16 %v1038, %v974
        %v1167 = vpack.c.b16 %v1039, %v975
        %v1168 = vpack.c.b16 %v1040, %v976
        %v1169 = vpack.c.b16 %v1041, %v977
        %v1170 = vpack.c.b16 %v1042, %v978
        %v1171 = vpack.c.b16 %v1043, %v979
        %v1172 = vpack.c.b16 %v1044, %v980
        %v1173 = vpack.c.b16 %v1045, %v981
        %v1174 = vpack.c.b16 %v1046, %v982
        %v1175 = vpack.c.b16 %v1047, %v983
        %v1176 = vpack.c.b16 %v1048, %v984
        %v1177 = vpack.c.b16 %v1049, %v985
        %v1178 = vpack.c.b16 %v1050, %v986
        %v1179 = vpack.c.b16 %v1051, %v987
        %v1180 = vpack.c.b16 %v1052, %v988
        %v1181 = vpack.c.b16 %v1053, %v989
        %v1182 = vpack.c.b16 %v1054, %v990
        %v1183 = vpack.c.b16 %v1055, %v991
        %v1184 = vpack.c.b16 %v1056, %v992
        %v1185 = vpack.c.b16 %v1057, %v993
        %v1186 = vpack.c.b16 %v1058, %v994
        %v1187 = vpack.c.b16 %v1059, %v995
        %v1188 = vpack.c.b16 %v1060, %v996
        %v1189 = vpack.c.b16 %v1061, %v997
        %v1190 = vpack.c.b16 %v1062, %v998
        %v1191 = vpack.c.b16 %v1063, %v999
        %v1192 = vpack.c.b16 %v1064, %v1000
        %v1193 = vpack.c.b16 %v1065, %v1001
        %v1194 = vpack.c.b16 %v1066, %v1002
        %v1195 = vpack.c.b16 %v1067, %v1003
        %v1196 = vpack.c.b16 %v1068, %v1004
        %v1197 = vpack.c.b16 %v1069, %v1005
        %v1198 = vpack.c.b16 %v1070, %v1006
        %v1199 = vpack.c.b16 %v1071, %v1007
        %v1200 = vpack.c.b16 %v1072, %v1008
        %v1201 = vpack.c.b16 %v1073, %v1009
        %v1202 = vpack.c.b16 %v1074, %v1010
        %v1203 = vpack.c.b16 %v1075, %v1011
        %v1204 = vpack.c.b16 %v1076, %v1012
        %v1205 = vpack.c.b16 %v1077, %v1013
        %v1206 = vpack.c.b16 %v1078, %v1014
        %v1207 = vpack.c.b16 %v1079, %v1015
        %v1208 = vpack.c.b16 %v1080, %v1016
        %v1209 = vpack.c.b16 %v1081, %v1017
        %v1210 = vpack.c.b16 %v1082, %v1018
        %v1211 = vpack.c.b16 %v1083, %v1019
        %v1212 = vpack.c.b16 %v1084, %v1020
        %v1213 = vpack.c.b16 %v1085, %v1021
        %v1214 = vpack.c.b16 %v1086, %v1022
        %v1215 = vpack.c.b16 %v1087, %v1023
        %v1216 = vpack.c.b16 %v1088, %v1024
        %v1217 = vpack.c.b16 %v1089, %v1025
        %v1218 = vpack.c.b16 %v1090, %v1026
        %v1219 = vpack.c.b16 %v1091, %v1027
        %v1220 = vpack.c.b16 %v1092, %v1028
        %v1221 = vpack.c.b16 %v1093, %v1029
        %v1222 = vpack.c.b16 %v1094, %v1030
        %v1223 = vpack.c.b16 %v1095, %v1031
        %v1224 = vpack.c.b16 %v1096, %v1032
        %v1225 = vpack.c.b16 %v1097, %v1033
        %v1226 = vpack.c.b16 %v1098, %v1034
        %v1227 = vpack.c.b16 %v1099, %v1035
        %v1228 = vpack.c.b16 %v1100, %v1036
        %v1229 = vpack.c.b16 %v1101, %v1037
        %v1359 = vsel %vm418, %v445, 0
        %1361 = vmatpush.bf16.msra.mxu0 0
        %1362 = vmatpush.bf16.msra.mxu0 0
        %1363 = vmatpush.bf16.msra.mxu0 0
        %1364 = vmatpush.bf16.msra.mxu0 0
        %1365 = vmatpush.bf16.msra.mxu0 0
        %1366 = vmatpush.bf16.msra.mxu0 0
        %1367 = vmatpush.bf16.msra.mxu0 %v1166
        %1368 = vmatpush.bf16.msra.mxu0 %v1102
        %1369 = vmatmul.bf16.gmra.mxu0 %v1359
        %v1370 = vpop.f32.mrf.mxu0
        %v1371 = vadd.f32 %v590, %v1370
        %v1372 = vpop.f32.mrf.mxu0
        %1373 = vdwg.mxu0
        %1374 = vmatpush.bf16.msra.mxu0 0
        %1375 = vmatpush.bf16.msra.mxu0 0
        %1376 = vmatpush.bf16.msra.mxu0 0
        %1377 = vmatpush.bf16.msra.mxu0 0
        %1378 = vmatpush.bf16.msra.mxu0 0
        %1379 = vmatpush.bf16.msra.mxu0 0
        %1380 = vmatpush.bf16.msra.mxu0 %v1167
        %1381 = vmatpush.bf16.msra.mxu0 %v1103
        %1382 = vmatmul.bf16.gmra.mxu0 %v1359
        %v1383 = vpop.f32.mrf.mxu0
        %v1384 = vadd.f32 %v591, %v1383
        %v1385 = vpop.f32.mrf.mxu0
        %1386 = vdwg.mxu0
        %1387 = vmatpush.bf16.msra.mxu0 0
        %1388 = vmatpush.bf16.msra.mxu0 0
        %1389 = vmatpush.bf16.msra.mxu0 0
        %1390 = vmatpush.bf16.msra.mxu0 0
        %1391 = vmatpush.bf16.msra.mxu0 0
        %1392 = vmatpush.bf16.msra.mxu0 0
        %1393 = vmatpush.bf16.msra.mxu0 %v1168
        %1394 = vmatpush.bf16.msra.mxu0 %v1104
        %1395 = vmatmul.bf16.gmra.mxu0 %v1359
        %v1396 = vpop.f32.mrf.mxu0
        %v1397 = vadd.f32 %v592, %v1396
        %v1398 = vpop.f32.mrf.mxu0
        %1399 = vdwg.mxu0
        %1400 = vmatpush.bf16.msra.mxu0 0
        %1401 = vmatpush.bf16.msra.mxu0 0
        %1402 = vmatpush.bf16.msra.mxu0 0
        %1403 = vmatpush.bf16.msra.mxu0 0
        %1404 = vmatpush.bf16.msra.mxu0 0
        %1405 = vmatpush.bf16.msra.mxu0 0
        %1406 = vmatpush.bf16.msra.mxu0 %v1169
        %1407 = vmatpush.bf16.msra.mxu0 %v1105
        %1408 = vmatmul.bf16.gmra.mxu0 %v1359
        %v1409 = vpop.f32.mrf.mxu0
        %v1410 = vadd.f32 %v593, %v1409
        %v1411 = vpop.f32.mrf.mxu0
        %1412 = vdwg.mxu0
        %1413 = vmatpush.bf16.msra.mxu0 0
        %1414 = vmatpush.bf16.msra.mxu0 0
        %1415 = vmatpush.bf16.msra.mxu0 0
        %1416 = vmatpush.bf16.msra.mxu0 0
        %1417 = vmatpush.bf16.msra.mxu0 0
        %1418 = vmatpush.bf16.msra.mxu0 0
        %1419 = vmatpush.bf16.msra.mxu0 %v1170
        %1420 = vmatpush.bf16.msra.mxu0 %v1106
        %1421 = vmatmul.bf16.gmra.mxu0 %v1359
        %v1422 = vpop.f32.mrf.mxu0
        %v1423 = vadd.f32 %v594, %v1422
        %v1424 = vpop.f32.mrf.mxu0
        %1425 = vdwg.mxu0
        %1426 = vmatpush.bf16.msra.mxu0 0
        %1427 = vmatpush.bf16.msra.mxu0 0
        %1428 = vmatpush.bf16.msra.mxu0 0
        %1429 = vmatpush.bf16.msra.mxu0 0
        %1430 = vmatpush.bf16.msra.mxu0 0
        %1431 = vmatpush.bf16.msra.mxu0 0
        %1432 = vmatpush.bf16.msra.mxu0 %v1171
        %1433 = vmatpush.bf16.msra.mxu0 %v1107
        %1434 = vmatmul.bf16.gmra.mxu0 %v1359
        %v1435 = vpop.f32.mrf.mxu0
        %v1436 = vadd.f32 %v595, %v1435
        %v1437 = vpop.f32.mrf.mxu0
        %1438 = vdwg.mxu0
        %1439 = vmatpush.bf16.msra.mxu0 0
        %1440 = vmatpush.bf16.msra.mxu0 0
        %1441 = vmatpush.bf16.msra.mxu0 0
        %1442 = vmatpush.bf16.msra.mxu0 0
        %1443 = vmatpush.bf16.msra.mxu0 0
        %1444 = vmatpush.bf16.msra.mxu0 0
        %1445 = vmatpush.bf16.msra.mxu0 %v1172
        %1446 = vmatpush.bf16.msra.mxu0 %v1108
        %1447 = vmatmul.bf16.gmra.mxu0 %v1359
        %v1448 = vpop.f32.mrf.mxu0
        %v1449 = vadd.f32 %v596, %v1448
        %v1450 = vpop.f32.mrf.mxu0
        %1451 = vdwg.mxu0
        %1452 = vmatpush.bf16.msra.mxu0 0
        %1453 = vmatpush.bf16.msra.mxu0 0
        %1454 = vmatpush.bf16.msra.mxu0 0
        %1455 = vmatpush.bf16.msra.mxu0 0
        %1456 = vmatpush.bf16.msra.mxu0 0
        %1457 = vmatpush.bf16.msra.mxu0 0
        %1458 = vmatpush.bf16.msra.mxu0 %v1173
        %1459 = vmatpush.bf16.msra.mxu0 %v1109
        %1460 = vmatmul.bf16.gmra.mxu0 %v1359
        %v1461 = vpop.f32.mrf.mxu0
        %v1462 = vadd.f32 %v597, %v1461
        %v1463 = vpop.f32.mrf.mxu0
        %1464 = vdwg.mxu0
        %1465 = vmatpush.bf16.msra.mxu0 0
        %1466 = vmatpush.bf16.msra.mxu0 0
        %1467 = vmatpush.bf16.msra.mxu0 0
        %1468 = vmatpush.bf16.msra.mxu0 0
        %1469 = vmatpush.bf16.msra.mxu0 0
        %1470 = vmatpush.bf16.msra.mxu0 0
        %1471 = vmatpush.bf16.msra.mxu0 %v1174
        %1472 = vmatpush.bf16.msra.mxu0 %v1110
        %1473 = vmatmul.bf16.gmra.mxu0 %v1359
        %v1474 = vpop.f32.mrf.mxu0
        %v1475 = vadd.f32 %v598, %v1474
        %v1476 = vpop.f32.mrf.mxu0
        %1477 = vdwg.mxu0
        %1478 = vmatpush.bf16.msra.mxu0 0
        %1479 = vmatpush.bf16.msra.mxu0 0
        %1480 = vmatpush.bf16.msra.mxu0 0
        %1481 = vmatpush.bf16.msra.mxu0 0
        %1482 = vmatpush.bf16.msra.mxu0 0
        %1483 = vmatpush.bf16.msra.mxu0 0
        %1484 = vmatpush.bf16.msra.mxu0 %v1175
        %1485 = vmatpush.bf16.msra.mxu0 %v1111
        %1486 = vmatmul.bf16.gmra.mxu0 %v1359
        %v1487 = vpop.f32.mrf.mxu0
        %v1488 = vadd.f32 %v599, %v1487
        %v1489 = vpop.f32.mrf.mxu0
        %1490 = vdwg.mxu0
        %1491 = vmatpush.bf16.msra.mxu0 0
        %1492 = vmatpush.bf16.msra.mxu0 0
        %1493 = vmatpush.bf16.msra.mxu0 0
        %1494 = vmatpush.bf16.msra.mxu0 0
        %1495 = vmatpush.bf16.msra.mxu0 0
        %1496 = vmatpush.bf16.msra.mxu0 0
        %1497 = vmatpush.bf16.msra.mxu0 %v1176
        %1498 = vmatpush.bf16.msra.mxu0 %v1112
        %1499 = vmatmul.bf16.gmra.mxu0 %v1359
        %v1500 = vpop.f32.mrf.mxu0
        %v1501 = vadd.f32 %v600, %v1500
        %v1502 = vpop.f32.mrf.mxu0
        %1503 = vdwg.mxu0
        %1504 = vmatpush.bf16.msra.mxu0 0
        %1505 = vmatpush.bf16.msra.mxu0 0
        %1506 = vmatpush.bf16.msra.mxu0 0
        %1507 = vmatpush.bf16.msra.mxu0 0
        %1508 = vmatpush.bf16.msra.mxu0 0
        %1509 = vmatpush.bf16.msra.mxu0 0
        %1510 = vmatpush.bf16.msra.mxu0 %v1177
        %1511 = vmatpush.bf16.msra.mxu0 %v1113
        %1512 = vmatmul.bf16.gmra.mxu0 %v1359
        %v1513 = vpop.f32.mrf.mxu0
        %v1514 = vadd.f32 %v601, %v1513
        %v1515 = vpop.f32.mrf.mxu0
        %1516 = vdwg.mxu0
        %1517 = vmatpush.bf16.msra.mxu0 0
        %1518 = vmatpush.bf16.msra.mxu0 0
        %1519 = vmatpush.bf16.msra.mxu0 0
        %1520 = vmatpush.bf16.msra.mxu0 0
        %1521 = vmatpush.bf16.msra.mxu0 0
        %1522 = vmatpush.bf16.msra.mxu0 0
        %1523 = vmatpush.bf16.msra.mxu0 %v1178
        %1524 = vmatpush.bf16.msra.mxu0 %v1114
        %1525 = vmatmul.bf16.gmra.mxu0 %v1359
        %v1526 = vpop.f32.mrf.mxu0
        %v1527 = vadd.f32 %v602, %v1526
        %v1528 = vpop.f32.mrf.mxu0
        %1529 = vdwg.mxu0
        %1530 = vmatpush.bf16.msra.mxu0 0
        %1531 = vmatpush.bf16.msra.mxu0 0
        %1532 = vmatpush.bf16.msra.mxu0 0
        %1533 = vmatpush.bf16.msra.mxu0 0
        %1534 = vmatpush.bf16.msra.mxu0 0
        %1535 = vmatpush.bf16.msra.mxu0 0
        %1536 = vmatpush.bf16.msra.mxu0 %v1179
        %1537 = vmatpush.bf16.msra.mxu0 %v1115
        %1538 = vmatmul.bf16.gmra.mxu0 %v1359
        %v1539 = vpop.f32.mrf.mxu0
        %v1540 = vadd.f32 %v603, %v1539
        %v1541 = vpop.f32.mrf.mxu0
        %1542 = vdwg.mxu0
        %1543 = vmatpush.bf16.msra.mxu0 0
        %1544 = vmatpush.bf16.msra.mxu0 0
        %1545 = vmatpush.bf16.msra.mxu0 0
        %1546 = vmatpush.bf16.msra.mxu0 0
        %1547 = vmatpush.bf16.msra.mxu0 0
        %1548 = vmatpush.bf16.msra.mxu0 0
        %1549 = vmatpush.bf16.msra.mxu0 %v1180
        %1550 = vmatpush.bf16.msra.mxu0 %v1116
        %1551 = vmatmul.bf16.gmra.mxu0 %v1359
        %v1552 = vpop.f32.mrf.mxu0
        %v1553 = vadd.f32 %v604, %v1552
        %v1554 = vpop.f32.mrf.mxu0
        %1555 = vdwg.mxu0
        %1556 = vmatpush.bf16.msra.mxu0 0
        %1557 = vmatpush.bf16.msra.mxu0 0
        %1558 = vmatpush.bf16.msra.mxu0 0
        %1559 = vmatpush.bf16.msra.mxu0 0
        %1560 = vmatpush.bf16.msra.mxu0 0
        %1561 = vmatpush.bf16.msra.mxu0 0
        %1562 = vmatpush.bf16.msra.mxu0 %v1181
        %1563 = vmatpush.bf16.msra.mxu0 %v1117
        %1564 = vmatmul.bf16.gmra.mxu0 %v1359
        %v1565 = vpop.f32.mrf.mxu0
        %v1566 = vadd.f32 %v605, %v1565
        %v1567 = vpop.f32.mrf.mxu0
        %1568 = vdwg.mxu0
        %1569 = vmatpush.bf16.msra.mxu0 0
        %1570 = vmatpush.bf16.msra.mxu0 0
        %1571 = vmatpush.bf16.msra.mxu0 0
        %1572 = vmatpush.bf16.msra.mxu0 0
        %1573 = vmatpush.bf16.msra.mxu0 0
        %1574 = vmatpush.bf16.msra.mxu0 0
        %1575 = vmatpush.bf16.msra.mxu0 %v1182
        %1576 = vmatpush.bf16.msra.mxu0 %v1118
        %1577 = vmatmul.bf16.gmra.mxu0 %v1359
        %v1578 = vpop.f32.mrf.mxu0
        %v1579 = vadd.f32 %v606, %v1578
        %v1580 = vpop.f32.mrf.mxu0
        %1581 = vdwg.mxu0
        %1582 = vmatpush.bf16.msra.mxu0 0
        %1583 = vmatpush.bf16.msra.mxu0 0
        %1584 = vmatpush.bf16.msra.mxu0 0
        %1585 = vmatpush.bf16.msra.mxu0 0
        %1586 = vmatpush.bf16.msra.mxu0 0
        %1587 = vmatpush.bf16.msra.mxu0 0
        %1588 = vmatpush.bf16.msra.mxu0 %v1183
        %1589 = vmatpush.bf16.msra.mxu0 %v1119
        %1590 = vmatmul.bf16.gmra.mxu0 %v1359
        %v1591 = vpop.f32.mrf.mxu0
        %v1592 = vadd.f32 %v607, %v1591
        %v1593 = vpop.f32.mrf.mxu0
        %1594 = vdwg.mxu0
        %1595 = vmatpush.bf16.msra.mxu0 0
        %1596 = vmatpush.bf16.msra.mxu0 0
        %1597 = vmatpush.bf16.msra.mxu0 0
        %1598 = vmatpush.bf16.msra.mxu0 0
        %1599 = vmatpush.bf16.msra.mxu0 0
        %1600 = vmatpush.bf16.msra.mxu0 0
        %1601 = vmatpush.bf16.msra.mxu0 %v1184
        %1602 = vmatpush.bf16.msra.mxu0 %v1120
        %1603 = vmatmul.bf16.gmra.mxu0 %v1359
        %v1604 = vpop.f32.mrf.mxu0
        %v1605 = vadd.f32 %v608, %v1604
        %v1606 = vpop.f32.mrf.mxu0
        %1607 = vdwg.mxu0
        %1608 = vmatpush.bf16.msra.mxu0 0
        %1609 = vmatpush.bf16.msra.mxu0 0
        %1610 = vmatpush.bf16.msra.mxu0 0
        %1611 = vmatpush.bf16.msra.mxu0 0
        %1612 = vmatpush.bf16.msra.mxu0 0
        %1613 = vmatpush.bf16.msra.mxu0 0
        %1614 = vmatpush.bf16.msra.mxu0 %v1185
        %1615 = vmatpush.bf16.msra.mxu0 %v1121
        %1616 = vmatmul.bf16.gmra.mxu0 %v1359
        %v1617 = vpop.f32.mrf.mxu0
        %v1618 = vadd.f32 %v609, %v1617
        %v1619 = vpop.f32.mrf.mxu0
        %1620 = vdwg.mxu0
        %1621 = vmatpush.bf16.msra.mxu0 0
        %1622 = vmatpush.bf16.msra.mxu0 0
        %1623 = vmatpush.bf16.msra.mxu0 0
        %1624 = vmatpush.bf16.msra.mxu0 0
        %1625 = vmatpush.bf16.msra.mxu0 0
        %1626 = vmatpush.bf16.msra.mxu0 0
        %1627 = vmatpush.bf16.msra.mxu0 %v1186
        %1628 = vmatpush.bf16.msra.mxu0 %v1122
        %1629 = vmatmul.bf16.gmra.mxu0 %v1359
        %v1630 = vpop.f32.mrf.mxu0
        %v1631 = vadd.f32 %v610, %v1630
        %v1632 = vpop.f32.mrf.mxu0
        %1633 = vdwg.mxu0
        %1634 = vmatpush.bf16.msra.mxu0 0
        %1635 = vmatpush.bf16.msra.mxu0 0
        %1636 = vmatpush.bf16.msra.mxu0 0
        %1637 = vmatpush.bf16.msra.mxu0 0
        %1638 = vmatpush.bf16.msra.mxu0 0
        %1639 = vmatpush.bf16.msra.mxu0 0
        %1640 = vmatpush.bf16.msra.mxu0 %v1187
        %1641 = vmatpush.bf16.msra.mxu0 %v1123
        %1642 = vmatmul.bf16.gmra.mxu0 %v1359
        %v1643 = vpop.f32.mrf.mxu0
        %v1644 = vadd.f32 %v611, %v1643
        %v1645 = vpop.f32.mrf.mxu0
        %1646 = vdwg.mxu0
        %1647 = vmatpush.bf16.msra.mxu0 0
        %1648 = vmatpush.bf16.msra.mxu0 0
        %1649 = vmatpush.bf16.msra.mxu0 0
        %1650 = vmatpush.bf16.msra.mxu0 0
        %1651 = vmatpush.bf16.msra.mxu0 0
        %1652 = vmatpush.bf16.msra.mxu0 0
        %1653 = vmatpush.bf16.msra.mxu0 %v1188
        %1654 = vmatpush.bf16.msra.mxu0 %v1124
        %1655 = vmatmul.bf16.gmra.mxu0 %v1359
        %v1656 = vpop.f32.mrf.mxu0
        %v1657 = vadd.f32 %v612, %v1656
        %v1658 = vpop.f32.mrf.mxu0
        %1659 = vdwg.mxu0
        %1660 = vmatpush.bf16.msra.mxu0 0
        %1661 = vmatpush.bf16.msra.mxu0 0
        %1662 = vmatpush.bf16.msra.mxu0 0
        %1663 = vmatpush.bf16.msra.mxu0 0
        %1664 = vmatpush.bf16.msra.mxu0 0
        %1665 = vmatpush.bf16.msra.mxu0 0
        %1666 = vmatpush.bf16.msra.mxu0 %v1189
        %1667 = vmatpush.bf16.msra.mxu0 %v1125
        %1668 = vmatmul.bf16.gmra.mxu0 %v1359
        %v1669 = vpop.f32.mrf.mxu0
        %v1670 = vadd.f32 %v613, %v1669
        %v1671 = vpop.f32.mrf.mxu0
        %1672 = vdwg.mxu0
        %1673 = vmatpush.bf16.msra.mxu0 0
        %1674 = vmatpush.bf16.msra.mxu0 0
        %1675 = vmatpush.bf16.msra.mxu0 0
        %1676 = vmatpush.bf16.msra.mxu0 0
        %1677 = vmatpush.bf16.msra.mxu0 0
        %1678 = vmatpush.bf16.msra.mxu0 0
        %1679 = vmatpush.bf16.msra.mxu0 %v1190
        %1680 = vmatpush.bf16.msra.mxu0 %v1126
        %1681 = vmatmul.bf16.gmra.mxu0 %v1359
        %v1682 = vpop.f32.mrf.mxu0
        %v1683 = vadd.f32 %v614, %v1682
        %v1684 = vpop.f32.mrf.mxu0
        %1685 = vdwg.mxu0
        %1686 = vmatpush.bf16.msra.mxu0 0
        %1687 = vmatpush.bf16.msra.mxu0 0
        %1688 = vmatpush.bf16.msra.mxu0 0
        %1689 = vmatpush.bf16.msra.mxu0 0
        %1690 = vmatpush.bf16.msra.mxu0 0
        %1691 = vmatpush.bf16.msra.mxu0 0
        %1692 = vmatpush.bf16.msra.mxu0 %v1191
        %1693 = vmatpush.bf16.msra.mxu0 %v1127
        %1694 = vmatmul.bf16.gmra.mxu0 %v1359
        %v1695 = vpop.f32.mrf.mxu0
        %v1696 = vadd.f32 %v615, %v1695
        %v1697 = vpop.f32.mrf.mxu0
        %1698 = vdwg.mxu0
        %1699 = vmatpush.bf16.msra.mxu0 0
        %1700 = vmatpush.bf16.msra.mxu0 0
        %1701 = vmatpush.bf16.msra.mxu0 0
        %1702 = vmatpush.bf16.msra.mxu0 0
        %1703 = vmatpush.bf16.msra.mxu0 0
        %1704 = vmatpush.bf16.msra.mxu0 0
        %1705 = vmatpush.bf16.msra.mxu0 %v1192
        %1706 = vmatpush.bf16.msra.mxu0 %v1128
        %1707 = vmatmul.bf16.gmra.mxu0 %v1359
        %v1708 = vpop.f32.mrf.mxu0
        %v1709 = vadd.f32 %v616, %v1708
        %v1710 = vpop.f32.mrf.mxu0
        %1711 = vdwg.mxu0
        %1712 = vmatpush.bf16.msra.mxu0 0
        %1713 = vmatpush.bf16.msra.mxu0 0
        %1714 = vmatpush.bf16.msra.mxu0 0
        %1715 = vmatpush.bf16.msra.mxu0 0
        %1716 = vmatpush.bf16.msra.mxu0 0
        %1717 = vmatpush.bf16.msra.mxu0 0
        %1718 = vmatpush.bf16.msra.mxu0 %v1193
        %1719 = vmatpush.bf16.msra.mxu0 %v1129
        %1720 = vmatmul.bf16.gmra.mxu0 %v1359
        %v1721 = vpop.f32.mrf.mxu0
        %v1722 = vadd.f32 %v617, %v1721
        %v1723 = vpop.f32.mrf.mxu0
        %1724 = vdwg.mxu0
        %1725 = vmatpush.bf16.msra.mxu0 0
        %1726 = vmatpush.bf16.msra.mxu0 0
        %1727 = vmatpush.bf16.msra.mxu0 0
        %1728 = vmatpush.bf16.msra.mxu0 0
        %1729 = vmatpush.bf16.msra.mxu0 0
        %1730 = vmatpush.bf16.msra.mxu0 0
        %1731 = vmatpush.bf16.msra.mxu0 %v1194
        %1732 = vmatpush.bf16.msra.mxu0 %v1130
        %1733 = vmatmul.bf16.gmra.mxu0 %v1359
        %v1734 = vpop.f32.mrf.mxu0
        %v1735 = vadd.f32 %v618, %v1734
        %v1736 = vpop.f32.mrf.mxu0
        %1737 = vdwg.mxu0
        %1738 = vmatpush.bf16.msra.mxu0 0
        %1739 = vmatpush.bf16.msra.mxu0 0
        %1740 = vmatpush.bf16.msra.mxu0 0
        %1741 = vmatpush.bf16.msra.mxu0 0
        %1742 = vmatpush.bf16.msra.mxu0 0
        %1743 = vmatpush.bf16.msra.mxu0 0
        %1744 = vmatpush.bf16.msra.mxu0 %v1195
        %1745 = vmatpush.bf16.msra.mxu0 %v1131
        %1746 = vmatmul.bf16.gmra.mxu0 %v1359
        %v1747 = vpop.f32.mrf.mxu0
        %v1748 = vadd.f32 %v619, %v1747
        %v1749 = vpop.f32.mrf.mxu0
        %1750 = vdwg.mxu0
        %1751 = vmatpush.bf16.msra.mxu0 0
        %1752 = vmatpush.bf16.msra.mxu0 0
        %1753 = vmatpush.bf16.msra.mxu0 0
        %1754 = vmatpush.bf16.msra.mxu0 0
        %1755 = vmatpush.bf16.msra.mxu0 0
        %1756 = vmatpush.bf16.msra.mxu0 0
        %1757 = vmatpush.bf16.msra.mxu0 %v1196
        %1758 = vmatpush.bf16.msra.mxu0 %v1132
        %1759 = vmatmul.bf16.gmra.mxu0 %v1359
        %v1760 = vpop.f32.mrf.mxu0
        %v1761 = vadd.f32 %v620, %v1760
        %v1762 = vpop.f32.mrf.mxu0
        %1763 = vdwg.mxu0
        %1764 = vmatpush.bf16.msra.mxu0 0
        %1765 = vmatpush.bf16.msra.mxu0 0
        %1766 = vmatpush.bf16.msra.mxu0 0
        %1767 = vmatpush.bf16.msra.mxu0 0
        %1768 = vmatpush.bf16.msra.mxu0 0
        %1769 = vmatpush.bf16.msra.mxu0 0
        %1770 = vmatpush.bf16.msra.mxu0 %v1197
        %1771 = vmatpush.bf16.msra.mxu0 %v1133
        %1772 = vmatmul.bf16.gmra.mxu0 %v1359
        %v1773 = vpop.f32.mrf.mxu0
        %v1774 = vadd.f32 %v621, %v1773
        %v1775 = vpop.f32.mrf.mxu0
        %1776 = vdwg.mxu0
        %1777 = vmatpush.bf16.msra.mxu0 0
        %1778 = vmatpush.bf16.msra.mxu0 0
        %1779 = vmatpush.bf16.msra.mxu0 0
        %1780 = vmatpush.bf16.msra.mxu0 0
        %1781 = vmatpush.bf16.msra.mxu0 0
        %1782 = vmatpush.bf16.msra.mxu0 0
        %1783 = vmatpush.bf16.msra.mxu0 %v1198
        %1784 = vmatpush.bf16.msra.mxu0 %v1134
        %1785 = vmatmul.bf16.gmra.mxu0 %v1359
        %v1786 = vpop.f32.mrf.mxu0
        %v1787 = vadd.f32 %v622, %v1786
        %v1788 = vpop.f32.mrf.mxu0
        %1789 = vdwg.mxu0
        %1790 = vmatpush.bf16.msra.mxu0 0
        %1791 = vmatpush.bf16.msra.mxu0 0
        %1792 = vmatpush.bf16.msra.mxu0 0
        %1793 = vmatpush.bf16.msra.mxu0 0
        %1794 = vmatpush.bf16.msra.mxu0 0
        %1795 = vmatpush.bf16.msra.mxu0 0
        %1796 = vmatpush.bf16.msra.mxu0 %v1199
        %1797 = vmatpush.bf16.msra.mxu0 %v1135
        %1798 = vmatmul.bf16.gmra.mxu0 %v1359
        %v1799 = vpop.f32.mrf.mxu0
        %v1800 = vadd.f32 %v623, %v1799
        %v1801 = vpop.f32.mrf.mxu0
        %1802 = vdwg.mxu0
        %1803 = vmatpush.bf16.msra.mxu0 0
        %1804 = vmatpush.bf16.msra.mxu0 0
        %1805 = vmatpush.bf16.msra.mxu0 0
        %1806 = vmatpush.bf16.msra.mxu0 0
        %1807 = vmatpush.bf16.msra.mxu0 0
        %1808 = vmatpush.bf16.msra.mxu0 0
        %1809 = vmatpush.bf16.msra.mxu0 %v1200
        %1810 = vmatpush.bf16.msra.mxu0 %v1136
        %1811 = vmatmul.bf16.gmra.mxu0 %v1359
        %v1812 = vpop.f32.mrf.mxu0
        %v1813 = vadd.f32 %v624, %v1812
        %v1814 = vpop.f32.mrf.mxu0
        %1815 = vdwg.mxu0
        %1816 = vmatpush.bf16.msra.mxu0 0
        %1817 = vmatpush.bf16.msra.mxu0 0
        %1818 = vmatpush.bf16.msra.mxu0 0
        %1819 = vmatpush.bf16.msra.mxu0 0
        %1820 = vmatpush.bf16.msra.mxu0 0
        %1821 = vmatpush.bf16.msra.mxu0 0
        %1822 = vmatpush.bf16.msra.mxu0 %v1201
        %1823 = vmatpush.bf16.msra.mxu0 %v1137
        %1824 = vmatmul.bf16.gmra.mxu0 %v1359
        %v1825 = vpop.f32.mrf.mxu0
        %v1826 = vadd.f32 %v625, %v1825
        %v1827 = vpop.f32.mrf.mxu0
        %1828 = vdwg.mxu0
        %1829 = vmatpush.bf16.msra.mxu0 0
        %1830 = vmatpush.bf16.msra.mxu0 0
        %1831 = vmatpush.bf16.msra.mxu0 0
        %1832 = vmatpush.bf16.msra.mxu0 0
        %1833 = vmatpush.bf16.msra.mxu0 0
        %1834 = vmatpush.bf16.msra.mxu0 0
        %1835 = vmatpush.bf16.msra.mxu0 %v1202
        %1836 = vmatpush.bf16.msra.mxu0 %v1138
        %1837 = vmatmul.bf16.gmra.mxu0 %v1359
        %v1838 = vpop.f32.mrf.mxu0
        %v1839 = vadd.f32 %v626, %v1838
        %v1840 = vpop.f32.mrf.mxu0
        %1841 = vdwg.mxu0
        %1842 = vmatpush.bf16.msra.mxu0 0
        %1843 = vmatpush.bf16.msra.mxu0 0
        %1844 = vmatpush.bf16.msra.mxu0 0
        %1845 = vmatpush.bf16.msra.mxu0 0
        %1846 = vmatpush.bf16.msra.mxu0 0
        %1847 = vmatpush.bf16.msra.mxu0 0
        %1848 = vmatpush.bf16.msra.mxu0 %v1203
        %1849 = vmatpush.bf16.msra.mxu0 %v1139
        %1850 = vmatmul.bf16.gmra.mxu0 %v1359
        %v1851 = vpop.f32.mrf.mxu0
        %v1852 = vadd.f32 %v627, %v1851
        %v1853 = vpop.f32.mrf.mxu0
        %1854 = vdwg.mxu0
        %1855 = vmatpush.bf16.msra.mxu0 0
        %1856 = vmatpush.bf16.msra.mxu0 0
        %1857 = vmatpush.bf16.msra.mxu0 0
        %1858 = vmatpush.bf16.msra.mxu0 0
        %1859 = vmatpush.bf16.msra.mxu0 0
        %1860 = vmatpush.bf16.msra.mxu0 0
        %1861 = vmatpush.bf16.msra.mxu0 %v1204
        %1862 = vmatpush.bf16.msra.mxu0 %v1140
        %1863 = vmatmul.bf16.gmra.mxu0 %v1359
        %v1864 = vpop.f32.mrf.mxu0
        %v1865 = vadd.f32 %v628, %v1864
        %v1866 = vpop.f32.mrf.mxu0
        %1867 = vdwg.mxu0
        %1868 = vmatpush.bf16.msra.mxu0 0
        %1869 = vmatpush.bf16.msra.mxu0 0
        %1870 = vmatpush.bf16.msra.mxu0 0
        %1871 = vmatpush.bf16.msra.mxu0 0
        %1872 = vmatpush.bf16.msra.mxu0 0
        %1873 = vmatpush.bf16.msra.mxu0 0
        %1874 = vmatpush.bf16.msra.mxu0 %v1205
        %1875 = vmatpush.bf16.msra.mxu0 %v1141
        %1876 = vmatmul.bf16.gmra.mxu0 %v1359
        %v1877 = vpop.f32.mrf.mxu0
        %v1878 = vadd.f32 %v629, %v1877
        %v1879 = vpop.f32.mrf.mxu0
        %1880 = vdwg.mxu0
        %1881 = vmatpush.bf16.msra.mxu0 0
        %1882 = vmatpush.bf16.msra.mxu0 0
        %1883 = vmatpush.bf16.msra.mxu0 0
        %1884 = vmatpush.bf16.msra.mxu0 0
        %1885 = vmatpush.bf16.msra.mxu0 0
        %1886 = vmatpush.bf16.msra.mxu0 0
        %1887 = vmatpush.bf16.msra.mxu0 %v1206
        %1888 = vmatpush.bf16.msra.mxu0 %v1142
        %1889 = vmatmul.bf16.gmra.mxu0 %v1359
        %v1890 = vpop.f32.mrf.mxu0
        %v1891 = vadd.f32 %v630, %v1890
        %v1892 = vpop.f32.mrf.mxu0
        %1893 = vdwg.mxu0
        %1894 = vmatpush.bf16.msra.mxu0 0
        %1895 = vmatpush.bf16.msra.mxu0 0
        %1896 = vmatpush.bf16.msra.mxu0 0
        %1897 = vmatpush.bf16.msra.mxu0 0
        %1898 = vmatpush.bf16.msra.mxu0 0
        %1899 = vmatpush.bf16.msra.mxu0 0
        %1900 = vmatpush.bf16.msra.mxu0 %v1207
        %1901 = vmatpush.bf16.msra.mxu0 %v1143
        %1902 = vmatmul.bf16.gmra.mxu0 %v1359
        %v1903 = vpop.f32.mrf.mxu0
        %v1904 = vadd.f32 %v631, %v1903
        %v1905 = vpop.f32.mrf.mxu0
        %1906 = vdwg.mxu0
        %1907 = vmatpush.bf16.msra.mxu0 0
        %1908 = vmatpush.bf16.msra.mxu0 0
        %1909 = vmatpush.bf16.msra.mxu0 0
        %1910 = vmatpush.bf16.msra.mxu0 0
        %1911 = vmatpush.bf16.msra.mxu0 0
        %1912 = vmatpush.bf16.msra.mxu0 0
        %1913 = vmatpush.bf16.msra.mxu0 %v1208
        %1914 = vmatpush.bf16.msra.mxu0 %v1144
        %1915 = vmatmul.bf16.gmra.mxu0 %v1359
        %v1916 = vpop.f32.mrf.mxu0
        %v1917 = vadd.f32 %v632, %v1916
        %v1918 = vpop.f32.mrf.mxu0
        %1919 = vdwg.mxu0
        %1920 = vmatpush.bf16.msra.mxu0 0
        %1921 = vmatpush.bf16.msra.mxu0 0
        %1922 = vmatpush.bf16.msra.mxu0 0
        %1923 = vmatpush.bf16.msra.mxu0 0
        %1924 = vmatpush.bf16.msra.mxu0 0
        %1925 = vmatpush.bf16.msra.mxu0 0
        %1926 = vmatpush.bf16.msra.mxu0 %v1209
        %1927 = vmatpush.bf16.msra.mxu0 %v1145
        %1928 = vmatmul.bf16.gmra.mxu0 %v1359
        %v1929 = vpop.f32.mrf.mxu0
        %v1930 = vadd.f32 %v633, %v1929
        %v1931 = vpop.f32.mrf.mxu0
        %1932 = vdwg.mxu0
        %1933 = vmatpush.bf16.msra.mxu0 0
        %1934 = vmatpush.bf16.msra.mxu0 0
        %1935 = vmatpush.bf16.msra.mxu0 0
        %1936 = vmatpush.bf16.msra.mxu0 0
        %1937 = vmatpush.bf16.msra.mxu0 0
        %1938 = vmatpush.bf16.msra.mxu0 0
        %1939 = vmatpush.bf16.msra.mxu0 %v1210
        %1940 = vmatpush.bf16.msra.mxu0 %v1146
        %1941 = vmatmul.bf16.gmra.mxu0 %v1359
        %v1942 = vpop.f32.mrf.mxu0
        %v1943 = vadd.f32 %v634, %v1942
        %v1944 = vpop.f32.mrf.mxu0
        %1945 = vdwg.mxu0
        %1946 = vmatpush.bf16.msra.mxu0 0
        %1947 = vmatpush.bf16.msra.mxu0 0
        %1948 = vmatpush.bf16.msra.mxu0 0
        %1949 = vmatpush.bf16.msra.mxu0 0
        %1950 = vmatpush.bf16.msra.mxu0 0
        %1951 = vmatpush.bf16.msra.mxu0 0
        %1952 = vmatpush.bf16.msra.mxu0 %v1211
        %1953 = vmatpush.bf16.msra.mxu0 %v1147
        %1954 = vmatmul.bf16.gmra.mxu0 %v1359
        %v1955 = vpop.f32.mrf.mxu0
        %v1956 = vadd.f32 %v635, %v1955
        %v1957 = vpop.f32.mrf.mxu0
        %1958 = vdwg.mxu0
        %1959 = vmatpush.bf16.msra.mxu0 0
        %1960 = vmatpush.bf16.msra.mxu0 0
        %1961 = vmatpush.bf16.msra.mxu0 0
        %1962 = vmatpush.bf16.msra.mxu0 0
        %1963 = vmatpush.bf16.msra.mxu0 0
        %1964 = vmatpush.bf16.msra.mxu0 0
        %1965 = vmatpush.bf16.msra.mxu0 %v1212
        %1966 = vmatpush.bf16.msra.mxu0 %v1148
        %1967 = vmatmul.bf16.gmra.mxu0 %v1359
        %v1968 = vpop.f32.mrf.mxu0
        %v1969 = vadd.f32 %v636, %v1968
        %v1970 = vpop.f32.mrf.mxu0
        %1971 = vdwg.mxu0
        %1972 = vmatpush.bf16.msra.mxu0 0
        %1973 = vmatpush.bf16.msra.mxu0 0
        %1974 = vmatpush.bf16.msra.mxu0 0
        %1975 = vmatpush.bf16.msra.mxu0 0
        %1976 = vmatpush.bf16.msra.mxu0 0
        %1977 = vmatpush.bf16.msra.mxu0 0
        %1978 = vmatpush.bf16.msra.mxu0 %v1213
        %1979 = vmatpush.bf16.msra.mxu0 %v1149
        %1980 = vmatmul.bf16.gmra.mxu0 %v1359
        %v1981 = vpop.f32.mrf.mxu0
        %v1982 = vadd.f32 %v637, %v1981
        %v1983 = vpop.f32.mrf.mxu0
        %1984 = vdwg.mxu0
        %1985 = vmatpush.bf16.msra.mxu0 0
        %1986 = vmatpush.bf16.msra.mxu0 0
        %1987 = vmatpush.bf16.msra.mxu0 0
        %1988 = vmatpush.bf16.msra.mxu0 0
        %1989 = vmatpush.bf16.msra.mxu0 0
        %1990 = vmatpush.bf16.msra.mxu0 0
        %1991 = vmatpush.bf16.msra.mxu0 %v1214
        %1992 = vmatpush.bf16.msra.mxu0 %v1150
        %1993 = vmatmul.bf16.gmra.mxu0 %v1359
        %v1994 = vpop.f32.mrf.mxu0
        %v1995 = vadd.f32 %v638, %v1994
        %v1996 = vpop.f32.mrf.mxu0
        %1997 = vdwg.mxu0
        %1998 = vmatpush.bf16.msra.mxu0 0
        %1999 = vmatpush.bf16.msra.mxu0 0
        %2000 = vmatpush.bf16.msra.mxu0 0
        %2001 = vmatpush.bf16.msra.mxu0 0
        %2002 = vmatpush.bf16.msra.mxu0 0
        %2003 = vmatpush.bf16.msra.mxu0 0
        %2004 = vmatpush.bf16.msra.mxu0 %v1215
        %2005 = vmatpush.bf16.msra.mxu0 %v1151
        %2006 = vmatmul.bf16.gmra.mxu0 %v1359
        %v2007 = vpop.f32.mrf.mxu0
        %v2008 = vadd.f32 %v639, %v2007
        %v2009 = vpop.f32.mrf.mxu0
        %2010 = vdwg.mxu0
        %2011 = vmatpush.bf16.msra.mxu0 0
        %2012 = vmatpush.bf16.msra.mxu0 0
        %2013 = vmatpush.bf16.msra.mxu0 0
        %2014 = vmatpush.bf16.msra.mxu0 0
        %2015 = vmatpush.bf16.msra.mxu0 0
        %2016 = vmatpush.bf16.msra.mxu0 0
        %2017 = vmatpush.bf16.msra.mxu0 %v1216
        %2018 = vmatpush.bf16.msra.mxu0 %v1152
        %2019 = vmatmul.bf16.gmra.mxu0 %v1359
        %v2020 = vpop.f32.mrf.mxu0
        %v2021 = vadd.f32 %v640, %v2020
        %v2022 = vpop.f32.mrf.mxu0
        %2023 = vdwg.mxu0
        %2024 = vmatpush.bf16.msra.mxu0 0
        %2025 = vmatpush.bf16.msra.mxu0 0
        %2026 = vmatpush.bf16.msra.mxu0 0
        %2027 = vmatpush.bf16.msra.mxu0 0
        %2028 = vmatpush.bf16.msra.mxu0 0
        %2029 = vmatpush.bf16.msra.mxu0 0
        %2030 = vmatpush.bf16.msra.mxu0 %v1217
        %2031 = vmatpush.bf16.msra.mxu0 %v1153
        %2032 = vmatmul.bf16.gmra.mxu0 %v1359
        %v2033 = vpop.f32.mrf.mxu0
        %v2034 = vadd.f32 %v641, %v2033
        %v2035 = vpop.f32.mrf.mxu0
        %2036 = vdwg.mxu0
        %2037 = vmatpush.bf16.msra.mxu0 0
        %2038 = vmatpush.bf16.msra.mxu0 0
        %2039 = vmatpush.bf16.msra.mxu0 0
        %2040 = vmatpush.bf16.msra.mxu0 0
        %2041 = vmatpush.bf16.msra.mxu0 0
        %2042 = vmatpush.bf16.msra.mxu0 0
        %2043 = vmatpush.bf16.msra.mxu0 %v1218
        %2044 = vmatpush.bf16.msra.mxu0 %v1154
        %2045 = vmatmul.bf16.gmra.mxu0 %v1359
        %v2046 = vpop.f32.mrf.mxu0
        %v2047 = vadd.f32 %v642, %v2046
        %v2048 = vpop.f32.mrf.mxu0
        %2049 = vdwg.mxu0
        %2050 = vmatpush.bf16.msra.mxu0 0
        %2051 = vmatpush.bf16.msra.mxu0 0
        %2052 = vmatpush.bf16.msra.mxu0 0
        %2053 = vmatpush.bf16.msra.mxu0 0
        %2054 = vmatpush.bf16.msra.mxu0 0
        %2055 = vmatpush.bf16.msra.mxu0 0
        %2056 = vmatpush.bf16.msra.mxu0 %v1219
        %2057 = vmatpush.bf16.msra.mxu0 %v1155
        %2058 = vmatmul.bf16.gmra.mxu0 %v1359
        %v2059 = vpop.f32.mrf.mxu0
        %v2060 = vadd.f32 %v643, %v2059
        %v2061 = vpop.f32.mrf.mxu0
        %2062 = vdwg.mxu0
        %2063 = vmatpush.bf16.msra.mxu0 0
        %2064 = vmatpush.bf16.msra.mxu0 0
        %2065 = vmatpush.bf16.msra.mxu0 0
        %2066 = vmatpush.bf16.msra.mxu0 0
        %2067 = vmatpush.bf16.msra.mxu0 0
        %2068 = vmatpush.bf16.msra.mxu0 0
        %2069 = vmatpush.bf16.msra.mxu0 %v1220
        %2070 = vmatpush.bf16.msra.mxu0 %v1156
        %2071 = vmatmul.bf16.gmra.mxu0 %v1359
        %v2072 = vpop.f32.mrf.mxu0
        %v2073 = vadd.f32 %v644, %v2072
        %v2074 = vpop.f32.mrf.mxu0
        %2075 = vdwg.mxu0
        %2076 = vmatpush.bf16.msra.mxu0 0
        %2077 = vmatpush.bf16.msra.mxu0 0
        %2078 = vmatpush.bf16.msra.mxu0 0
        %2079 = vmatpush.bf16.msra.mxu0 0
        %2080 = vmatpush.bf16.msra.mxu0 0
        %2081 = vmatpush.bf16.msra.mxu0 0
        %2082 = vmatpush.bf16.msra.mxu0 %v1221
        %2083 = vmatpush.bf16.msra.mxu0 %v1157
        %2084 = vmatmul.bf16.gmra.mxu0 %v1359
        %v2085 = vpop.f32.mrf.mxu0
        %v2086 = vadd.f32 %v645, %v2085
        %v2087 = vpop.f32.mrf.mxu0
        %2088 = vdwg.mxu0
        %2089 = vmatpush.bf16.msra.mxu0 0
        %2090 = vmatpush.bf16.msra.mxu0 0
        %2091 = vmatpush.bf16.msra.mxu0 0
        %2092 = vmatpush.bf16.msra.mxu0 0
        %2093 = vmatpush.bf16.msra.mxu0 0
        %2094 = vmatpush.bf16.msra.mxu0 0
        %2095 = vmatpush.bf16.msra.mxu0 %v1222
        %2096 = vmatpush.bf16.msra.mxu0 %v1158
        %2097 = vmatmul.bf16.gmra.mxu0 %v1359
        %v2098 = vpop.f32.mrf.mxu0
        %v2099 = vadd.f32 %v646, %v2098
        %v2100 = vpop.f32.mrf.mxu0
        %2101 = vdwg.mxu0
        %2102 = vmatpush.bf16.msra.mxu0 0
        %2103 = vmatpush.bf16.msra.mxu0 0
        %2104 = vmatpush.bf16.msra.mxu0 0
        %2105 = vmatpush.bf16.msra.mxu0 0
        %2106 = vmatpush.bf16.msra.mxu0 0
        %2107 = vmatpush.bf16.msra.mxu0 0
        %2108 = vmatpush.bf16.msra.mxu0 %v1223
        %2109 = vmatpush.bf16.msra.mxu0 %v1159
        %2110 = vmatmul.bf16.gmra.mxu0 %v1359
        %v2111 = vpop.f32.mrf.mxu0
        %v2112 = vadd.f32 %v647, %v2111
        %v2113 = vpop.f32.mrf.mxu0
        %2114 = vdwg.mxu0
        %2115 = vmatpush.bf16.msra.mxu0 0
        %2116 = vmatpush.bf16.msra.mxu0 0
        %2117 = vmatpush.bf16.msra.mxu0 0
        %2118 = vmatpush.bf16.msra.mxu0 0
        %2119 = vmatpush.bf16.msra.mxu0 0
        %2120 = vmatpush.bf16.msra.mxu0 0
        %2121 = vmatpush.bf16.msra.mxu0 %v1224
        %2122 = vmatpush.bf16.msra.mxu0 %v1160
        %2123 = vmatmul.bf16.gmra.mxu0 %v1359
        %v2124 = vpop.f32.mrf.mxu0
        %v2125 = vadd.f32 %v648, %v2124
        %v2126 = vpop.f32.mrf.mxu0
        %2127 = vdwg.mxu0
        %2128 = vmatpush.bf16.msra.mxu0 0
        %2129 = vmatpush.bf16.msra.mxu0 0
        %2130 = vmatpush.bf16.msra.mxu0 0
        %2131 = vmatpush.bf16.msra.mxu0 0
        %2132 = vmatpush.bf16.msra.mxu0 0
        %2133 = vmatpush.bf16.msra.mxu0 0
        %2134 = vmatpush.bf16.msra.mxu0 %v1225
        %2135 = vmatpush.bf16.msra.mxu0 %v1161
        %2136 = vmatmul.bf16.gmra.mxu0 %v1359
        %v2137 = vpop.f32.mrf.mxu0
        %v2138 = vadd.f32 %v649, %v2137
        %v2139 = vpop.f32.mrf.mxu0
        %2140 = vdwg.mxu0
        %2141 = vmatpush.bf16.msra.mxu0 0
        %2142 = vmatpush.bf16.msra.mxu0 0
        %2143 = vmatpush.bf16.msra.mxu0 0
        %2144 = vmatpush.bf16.msra.mxu0 0
        %2145 = vmatpush.bf16.msra.mxu0 0
        %2146 = vmatpush.bf16.msra.mxu0 0
        %2147 = vmatpush.bf16.msra.mxu0 %v1226
        %2148 = vmatpush.bf16.msra.mxu0 %v1162
        %2149 = vmatmul.bf16.gmra.mxu0 %v1359
        %v2150 = vpop.f32.mrf.mxu0
        %v2151 = vadd.f32 %v650, %v2150
        %v2152 = vpop.f32.mrf.mxu0
        %2153 = vdwg.mxu0
        %2154 = vmatpush.bf16.msra.mxu0 0
        %2155 = vmatpush.bf16.msra.mxu0 0
        %2156 = vmatpush.bf16.msra.mxu0 0
        %2157 = vmatpush.bf16.msra.mxu0 0
        %2158 = vmatpush.bf16.msra.mxu0 0
        %2159 = vmatpush.bf16.msra.mxu0 0
        %2160 = vmatpush.bf16.msra.mxu0 %v1227
        %2161 = vmatpush.bf16.msra.mxu0 %v1163
        %2162 = vmatmul.bf16.gmra.mxu0 %v1359
        %v2163 = vpop.f32.mrf.mxu0
        %v2164 = vadd.f32 %v651, %v2163
        %v2165 = vpop.f32.mrf.mxu0
        %2166 = vdwg.mxu0
        %2167 = vmatpush.bf16.msra.mxu0 0
        %2168 = vmatpush.bf16.msra.mxu0 0
        %2169 = vmatpush.bf16.msra.mxu0 0
        %2170 = vmatpush.bf16.msra.mxu0 0
        %2171 = vmatpush.bf16.msra.mxu0 0
        %2172 = vmatpush.bf16.msra.mxu0 0
        %2173 = vmatpush.bf16.msra.mxu0 %v1228
        %2174 = vmatpush.bf16.msra.mxu0 %v1164
        %2175 = vmatmul.bf16.gmra.mxu0 %v1359
        %v2176 = vpop.f32.mrf.mxu0
        %v2177 = vadd.f32 %v652, %v2176
        %v2178 = vpop.f32.mrf.mxu0
        %2179 = vdwg.mxu0
        %2180 = vmatpush.bf16.msra.mxu0 0
        %2181 = vmatpush.bf16.msra.mxu0 0
        %2182 = vmatpush.bf16.msra.mxu0 0
        %2183 = vmatpush.bf16.msra.mxu0 0
        %2184 = vmatpush.bf16.msra.mxu0 0
        %2185 = vmatpush.bf16.msra.mxu0 0
        %2186 = vmatpush.bf16.msra.mxu0 %v1229
        %2187 = vmatpush.bf16.msra.mxu0 %v1165
        %2188 = vmatmul.bf16.gmra.mxu0 %v1359
        %v2189 = vpop.f32.mrf.mxu0
        %v2190 = vadd.f32 %v653, %v2189
        %v2191 = vpop.f32.mrf.mxu0
        %2192 = vdwg.mxu0
        %2193 = vst [vmem:[%s369] sm:$0xff] %v1371
        %2194 = vst [vmem:[%s369 + $0x8] sm:$0xff] %v1384
        %2195 = vst [vmem:[%s369 + $0x10] sm:$0xff] %v1397
        %2196 = vst [vmem:[%s369 + $0x18] sm:$0xff] %v1410
        %2197 = vst [vmem:[%s369 + $0x20] sm:$0xff] %v1423
        %2198 = vst [vmem:[%s369 + $0x28] sm:$0xff] %v1436
        %2199 = vst [vmem:[%s369 + $0x30] sm:$0xff] %v1449
        %2200 = vst [vmem:[%s369 + $0x38] sm:$0xff] %v1462
        %2201 = vst [vmem:[%s369 + $0x40] sm:$0xff] %v1475
        %2202 = vst [vmem:[%s369 + $0x48] sm:$0xff] %v1488
        %2203 = vst [vmem:[%s369 + $0x50] sm:$0xff] %v1501
        %2204 = vst [vmem:[%s369 + $0x58] sm:$0xff] %v1514
        %2205 = vst [vmem:[%s369 + $0x60] sm:$0xff] %v1527
        %2206 = vst [vmem:[%s369 + $0x68] sm:$0xff] %v1540
        %2207 = vst [vmem:[%s369 + $0x70] sm:$0xff] %v1553
        %2208 = vst [vmem:[%s369 + $0x78] sm:$0xff] %v1566
        %2209 = vst [vmem:[%s369 + $0x80] sm:$0xff] %v1579
        %2210 = vst [vmem:[%s369 + $0x88] sm:$0xff] %v1592
        %2211 = vst [vmem:[%s369 + $0x90] sm:$0xff] %v1605
        %2212 = vst [vmem:[%s369 + $0x98] sm:$0xff] %v1618
        %2213 = vst [vmem:[%s369 + $0xa0] sm:$0xff] %v1631
        %2214 = vst [vmem:[%s369 + $0xa8] sm:$0xff] %v1644
        %2215 = vst [vmem:[%s369 + $0xb0] sm:$0xff] %v1657
        %2216 = vst [vmem:[%s369 + $0xb8] sm:$0xff] %v1670
        %2217 = vst [vmem:[%s369 + $0xc0] sm:$0xff] %v1683
        %2218 = vst [vmem:[%s369 + $0xc8] sm:$0xff] %v1696
        %2219 = vst [vmem:[%s369 + $0xd0] sm:$0xff] %v1709
        %2220 = vst [vmem:[%s369 + $0xd8] sm:$0xff] %v1722
        %2221 = vst [vmem:[%s369 + $0xe0] sm:$0xff] %v1735
        %2222 = vst [vmem:[%s369 + $0xe8] sm:$0xff] %v1748
        %2223 = vst [vmem:[%s369 + $0xf0] sm:$0xff] %v1761
        %2224 = vst [vmem:[%s369 + $0xf8] sm:$0xff] %v1774
        %2225 = vst [vmem:[%s369 + $0x100] sm:$0xff] %v1787
        %2226 = vst [vmem:[%s369 + $0x108] sm:$0xff] %v1800
        %2227 = vst [vmem:[%s369 + $0x110] sm:$0xff] %v1813
        %2228 = vst [vmem:[%s369 + $0x118] sm:$0xff] %v1826
        %2229 = vst [vmem:[%s369 + $0x120] sm:$0xff] %v1839
        %2230 = vst [vmem:[%s369 + $0x128] sm:$0xff] %v1852
        %2231 = vst [vmem:[%s369 + $0x130] sm:$0xff] %v1865
        %2232 = vst [vmem:[%s369 + $0x138] sm:$0xff] %v1878
        %2233 = vst [vmem:[%s369 + $0x140] sm:$0xff] %v1891
        %2234 = vst [vmem:[%s369 + $0x148] sm:$0xff] %v1904
        %2235 = vst [vmem:[%s369 + $0x150] sm:$0xff] %v1917
        %2236 = vst [vmem:[%s369 + $0x158] sm:$0xff] %v1930
        %2237 = vst [vmem:[%s369 + $0x160] sm:$0xff] %v1943
        %2238 = vst [vmem:[%s369 + $0x168] sm:$0xff] %v1956
        %2239 = vst [vmem:[%s369 + $0x170] sm:$0xff] %v1969
        %2240 = vst [vmem:[%s369 + $0x178] sm:$0xff] %v1982
        %2241 = vst [vmem:[%s369 + $0x180] sm:$0xff] %v1995
        %2242 = vst [vmem:[%s369 + $0x188] sm:$0xff] %v2008
        %2243 = vst [vmem:[%s369 + $0x190] sm:$0xff] %v2021
        %2244 = vst [vmem:[%s369 + $0x198] sm:$0xff] %v2034
        %2245 = vst [vmem:[%s369 + $0x1a0] sm:$0xff] %v2047
        %2246 = vst [vmem:[%s369 + $0x1a8] sm:$0xff] %v2060
        %2247 = vst [vmem:[%s369 + $0x1b0] sm:$0xff] %v2073
        %2248 = vst [vmem:[%s369 + $0x1b8] sm:$0xff] %v2086
        %2249 = vst [vmem:[%s369 + $0x1c0] sm:$0xff] %v2099
        %2250 = vst [vmem:[%s369 + $0x1c8] sm:$0xff] %v2112
        %2251 = vst [vmem:[%s369 + $0x1d0] sm:$0xff] %v2125
        %2252 = vst [vmem:[%s369 + $0x1d8] sm:$0xff] %v2138
        %2253 = vst [vmem:[%s369 + $0x1e0] sm:$0xff] %v2151
        %2254 = vst [vmem:[%s369 + $0x1e8] sm:$0xff] %v2164
        %2255 = vst [vmem:[%s369 + $0x1f0] sm:$0xff] %v2177
        %2256 = vst [vmem:[%s369 + $0x1f8] sm:$0xff] %v2190
        %s2257 = smul.u32 64, %s20
        %p2258 = scmp.lt.s32.totalorder %s2257, 127
        %s2259 = scalar_select %p2258, %s2257, 127
        %s2260 = smul.addr %s2259, 8
        %s2261 = scalar_lea.vmem %s7, %s2260
        // Predicated region
        $region65: #{ann_flowfield_forward.1} parent=47 // pred_check
          %p2262 = pneg %p195
        $region66: #{ann_flowfield_forward.1} parent=47 // pred_check_branch
          %2264 = sbr.rel (%p2262) target = $region68
        $region67: #{ann_flowfield_forward.1} parent=47 // pred_region
          %s2265 = smul.u32 64, %s20
        $region68: #{ann_flowfield_forward.1} parent=47 // pred_fallthru
          _
      $region48: #{ann_flowfield_forward.1} parent=5 // pred_fallthru
        _
      %p2266 = scmp.le.s32.totalorder 2, %s15
      // Predicated region
      $region69: #{ann_flowfield_forward.1} parent=5 // pred_check
        %p2267 = pneg %p2266
      $region70: #{ann_flowfield_forward.1} parent=5 // pred_check_branch
        %2269 = sbr.rel (%p2267) target = $region72
      $region71: #{ann_flowfield_forward.1} parent=5 // pred_region
        %s2270 = ssub.s32 %s15, 2
        // Predicated region
        $region73: #{ann_flowfield_forward.1} parent=71 // pred_check
          %p2271 = pneg %p201
        $region74: #{ann_flowfield_forward.1} parent=71 // pred_check_branch
          %2273 = sbr.rel (%p2271) target = $region76
        $region75: #{ann_flowfield_forward.1} parent=71 // pred_region
          %s2274 = smul.u32 64, %s21
          %p2275 = scmp.lt.s32.totalorder %s2274, 127
          %s2276 = scalar_select %p2275, %s2274, 127
          %s2277 = smul.addr %s2276, 8
          %s2278 = scalar_lea.vmem %s7, %s2277
        $region76: #{ann_flowfield_forward.1} parent=71 // pred_fallthru
          _
      $region72: #{ann_flowfield_forward.1} parent=5 // pred_fallthru
        _
    $region6: #{ann_flowfield_forward.1} parent=1 // loop_footer
      %s19 = sadd.s32 1, %s15
    $region7: #{ann_flowfield_forward.1} parent=1 // loop_footer_branch
      %14 = sbr.rel target = $region3
    $region8: #{ann_flowfield_forward.1} parent=1 // loop_exit
      _
    %2279 = vsyncpa [#allocation3], 1
    %s2280 = scalar_lea.sflag [#allocation3], 1
    %2281 = vsyncpa %s2280, 1
    %2282 = vsyncpa [#allocation5], 1

</llo_original>
